<compile_context>
chip_gen: v7x
topology: tpu7x:2x2x1
jax: 0.10.0
libtpu: 0.0.40
codegen_flags: <defaults>
</compile_context>

<pallas_src>
import functools

import jax
import jax.numpy as jnp
from jax.experimental import pallas as pl
from jax.experimental.pallas import tpu as pltpu

_LANE = 128


def _round_up(x, m):
    return ((x + m - 1) // m) * m


# ------------------------------------------------------------------- kernel --

def _fused_kernel(x_ref,
                  ow1_ref, ob1_ref, ow2_ref, ob2_ref,        # shared obj tower (bf16 W / f32 b)
                  pw1_ref, pb1_ref, pw2_ref, pb2_ref,        # pre_in tower
                  xw1_ref, xb1_ref, xw2_ref, xb2_ref,        # pre_ex tower (concat folded in W1)
                  lv_ref,                                    # [tile_l, E_pad] label-vector tile
                  scores_ref, emb_ref,                       # outputs [TB, tile_l], [TB, E_pad]
                  emb_sc,                                    # VMEM scratch [TB, E_pad] f32
                  *, obj_visual_d):
    f32 = jnp.float32
    bf16 = jnp.bfloat16

    # ---- the 4-layer MLP runs once per batch tile (first label block only) ----
    @pl.when(pl.program_id(1) == 0)
    def _compute_embedding():
        x = x_ref[...]                                       # [TB, Dpre] bf16
        d_pre = x.shape[1]
        # TODO(synk): for production dims lane-align obj_visual_d / d_pre (pad ow1/pw1 rows)
        #             so these lane slices stay vreg-aligned; harmless at toy sizes.
        sbj = x[:, :obj_visual_d]
        obj = x[:, d_pre - obj_visual_d:]

        def mlp(v, w1, b1, w2, b2):
            h = jnp.dot(v, w1[...], preferred_element_type=f32) + b1[...]
            h = jnp.maximum(h, 0.0).astype(bf16)
            return jnp.dot(h, w2[...], preferred_element_type=f32) + b2[...]

        # shared obj tower (weights VMEM-resident; no batch-axis concat copy)
        sbj_emb = mlp(sbj, ow1_ref, ob1_ref, ow2_ref, ob2_ref)   # [TB, E_obj_pad] f32
        obj_emb = mlp(obj, ow1_ref, ob1_ref, ow2_ref, ob2_ref)
        pre0 = mlp(x, pw1_ref, pb1_ref, pw2_ref, pb2_ref)        # [TB, E_pre_pad] f32

        # lane-aligned concat (each piece is a multiple of 128 lanes) -> ONE merged-K matmul
        feat = jnp.concatenate([sbj_emb.astype(bf16), pre0.astype(bf16),
                                obj_emb.astype(bf16)], axis=-1)
        hx = jnp.dot(feat, xw1_ref[...], preferred_element_type=f32) + xb1_ref[...]
        hx = jnp.maximum(hx, 0.0).astype(bf16)
        emb = jnp.dot(hx, xw2_ref[...], preferred_element_type=f32) + xb2_ref[...]

        emb_sc[...] = emb
        emb_ref[...] = emb.astype(emb_ref.dtype)             # padded emb cols are exactly 0

    # ---- order-violation scores for THIS label tile (pure VPU/XLU, bounded temp) ----
    emb = emb_sc[...]                                        # [TB, E_pad] f32
    lv = lv_ref[...]                                         # [tile_l, E_pad] f32
    viol = jnp.maximum(lv[None, :, :] - emb[:, None, :], 0.0)
    scores_ref[...] = -jnp.sum(viol * viol, axis=-1)         # [TB, tile_l]


# ------------------------------------------------------------------ wrapper --

def _device_kind():
    try:
        return jax.devices()[0].device_kind.lower()
    except Exception:  # pragma: no cover
        return ""


def predicate_visual_forward(kp, vfs, *, obj_visual_d, n_labels, embedding_d,
                             tile_b=None, tile_l=_LANE):
    """Fused PredicateVisual.forward. Returns (all_scores [B, n_labels],
    pre_embedding [B, embedding_d]). The [:B, :n_labels]/[:embedding_d] slices are
    MANDATORY: padded label rows / padded columns hold garbage / zeros."""
    B, d_pre = vfs.shape

    kind = _device_kind()
    if tile_b is None:
        # v5-class: 128-wide MXU; v6e/v7x (and unknown): 256-wide MXU -> bigger M tile
        tile_b = 128 if "v5" in kind else 256
    # v4/v5/v6 have 128 MiB physical VMEM -> 96 MiB scoped; v7x (64 MiB) / unknown -> 48 MiB
    vmem_limit = (96 << 20) if any(k in kind for k in ("v4", "v5", "v6")) else (48 << 20)

    b_pad = _round_up(B, 8)
    tb = min(tile_b, b_pad)
    b_pad = _round_up(b_pad, tb)

    x = vfs.astype(jnp.bfloat16)                 # bf16 input: halves x DMA bytes + VMEM
    if b_pad != B:                               # skip the extra HBM pass when aligned
        x = jnp.pad(x, ((0, b_pad - B), (0, 0)))

    weights = (kp["ow1"], kp["ob1"], kp["ow2"], kp["ob2"],
               kp["pw1"], kp["pb1"], kp["pw2"], kp["pb2"],
               kp["xw1"], kp["xb1"], kp["xw2"], kp["xb2"])
    lv = kp["lv"]
    l_pad, e_pad = lv.shape
    tl = min(tile_l, l_pad)
    assert l_pad % tl == 0

    grid = (b_pad // tb, l_pad // tl)

    in_specs = [pl.BlockSpec((tb, d_pre), lambda i, l: (i, 0))]
    for w in weights:
        # pinned (same block every grid step) + single-buffered -> one VMEM copy, no re-DMA
        in_specs.append(pl.BlockSpec(w.shape, lambda i, l, _n=w.ndim: (0,) * _n,
                                     pipeline_mode=pl.Buffered(1)))
    # label-vector tile streams over the inner grid axis (default double buffering)
    in_specs.append(pl.BlockSpec((tl, e_pad), lambda i, l: (l, 0)))

    out_specs = (pl.BlockSpec((tb, tl), lambda i, l: (i, l)),      # lane-dense score blocks
                 pl.BlockSpec((tb, e_pad), lambda i, l: (i, 0)))   # emb resident across l
    out_shape = (jax.ShapeDtypeStruct((b_pad, l_pad), jnp.float32),
                 jax.ShapeDtypeStruct((b_pad, e_pad), jnp.float32))

    scores_p, emb_p = pl.pallas_call(
        functools.partial(_fused_kernel, obj_visual_d=obj_visual_d),
        out_shape=out_shape,
        grid=grid,
        in_specs=in_specs,
        out_specs=out_specs,
        scratch_shapes=[pltpu.VMEM((tb, e_pad), jnp.float32)],
        compiler_params=pltpu.CompilerParams(
            dimension_semantics=("parallel", "arbitrary"),
            vmem_limit_bytes=vmem_limit),
    )(x, *weights, lv)

    # mandatory slices: drop padded batch rows, garbage padded-label columns, zero emb pad
    return scores_p[:B, :n_labels], emb_p[:B, :embedding_d]


# ------------------------------------------------------------- param set-up --

def _linear_params(key, din, dout):
    """Deterministic PyTorch-style uniform(-1/sqrt(din), 1/sqrt(din)) init."""
    kw, kb = jax.random.split(key)
    bound = 1.0 / jnp.sqrt(jnp.float32(din))
    w = jax.random.uniform(kw, (din, dout), jnp.float32, -bound, bound)
    b = jax.random.uniform(kb, (1, dout), jnp.float32, -bound, bound)
    return w, b


def make_params(key, obj_visual_d, obj_hidden_d, obj_embedding_d,
                pre_visual_d, pre_hidden_d, pre_embedding_d,
                n_obj_labels, n_pre_labels):
    keys = jax.random.split(key, 8)
    ex_d = obj_embedding_d * 2 + pre_embedding_d

    obj_w1, obj_b1 = _linear_params(keys[0], obj_visual_d, obj_hidden_d)
    obj_w2, obj_b2 = _linear_params(keys[1], obj_hidden_d, obj_embedding_d)

    pin_w1, pin_b1 = _linear_params(keys[2], pre_visual_d, pre_hidden_d)
    pin_w2, pin_b2 = _linear_params(keys[3], pre_hidden_d, pre_embedding_d)

    pex_w1, pex_b1 = _linear_params(keys[4], ex_d, ex_d)
    pex_w2, pex_b2 = _linear_params(keys[5], ex_d, pre_embedding_d)

    obj_label_vecs = jax.random.normal(keys[6], (n_obj_labels, obj_embedding_d), jnp.float32)
    pre_label_vecs = jax.random.normal(keys[7], (n_pre_labels, pre_embedding_d), jnp.float32)

    return {
        "obj": (obj_w1, obj_b1, obj_w2, obj_b2),
        "pre_in": (pin_w1, pin_b1, pin_w2, pin_b2),
        "pre_ex": (pex_w1, pex_b1, pex_w2, pex_b2),
        "obj_label_vecs": obj_label_vecs,
        "pre_label_vecs": pre_label_vecs,
    }
    # TODO(synk): pretrained obj_embedding weights (obj_weights_path) and pickled label
    #             vectors are synthesized deterministically, not loaded from disk.


def prepare_kernel_params(params, lane=_LANE, tile_l=_LANE):
    """One-time prep: lane-pad (zero-pad) hidden + embedding dims to 128, scatter the pre_ex
    W1 rows to the lane-aligned concat positions (so the in-kernel concat is a cheap 128-aligned
    lane concat + ONE merged-K matmul), pad the label table to the label-tile size, and cast
    MXU operands to bf16 (f32 accumulation). Zero padding keeps the math exact."""
    ow1, ob1, ow2, ob2 = params["obj"]
    pw1, pb1, pw2, pb2 = params["pre_in"]
    xw1, xb1, xw2, xb2 = params["pre_ex"]
    lv = params["pre_label_vecs"]

    e_obj, e_pre = ow2.shape[1], pw2.shape[1]
    h_obj, h_pre = ow1.shape[1], pw1.shape[1]
    ex_h = xw1.shape[1]                       # pre_ex hidden (= 2*e_obj + e_pre)
    n_lab = lv.shape[0]

    h_obj_p = _round_up(h_obj, lane)
    h_pre_p = _round_up(h_pre, lane)
    e_obj_p = _round_up(e_obj, lane)
    e_pre_p = _round_up(e_pre, lane)
    ex_h_p = _round_up(ex_h, lane)
    ex_in_p = 2 * e_obj_p + e_pre_p
    l_p = _round_up(n_lab, tile_l)

    def pad2(a, r, c):
        return jnp.pad(a, ((0, r - a.shape[0]), (0, c - a.shape[1])))

    ow1_p, ob1_p = pad2(ow1, ow1.shape[0], h_obj_p), pad2(ob1, 1, h_obj_p)
    ow2_p, ob2_p = pad2(ow2, h_obj_p, e_obj_p), pad2(ob2, 1, e_obj_p)
    pw1_p, pb1_p = pad2(pw1, pw1.shape[0], h_pre_p), pad2(pb1, 1, h_pre_p)
    pw2_p, pb2_p = pad2(pw2, h_pre_p, e_pre_p), pad2(pb2, 1, e_pre_p)

    # pre_ex L1: scatter row groups of W1 to the padded concat layout [sbj | pre0 | obj]
    xw1_p = jnp.zeros((ex_in_p, ex_h_p), jnp.float32)
    xw1_p = xw1_p.at[:e_obj, :ex_h].set(xw1[:e_obj])
    xw1_p = xw1_p.at[e_obj_p:e_obj_p + e_pre, :ex_h].set(xw1[e_obj:e_obj + e_pre])
    xw1_p = xw1_p.at[e_obj_p + e_pre_p:e_obj_p + e_pre_p + e_obj, :ex_h].set(xw1[e_obj + e_pre:])
    xb1_p = pad2(xb1, 1, ex_h_p)
    xw2_p, xb2_p = pad2(xw2, ex_h_p, e_pre_p), pad2(xb2, 1, e_pre_p)
    lv_p = pad2(lv, l_p, e_pre_p)

    bf16 = jnp.bfloat16
    return {
        "ow1": ow1_p.astype(bf16), "ob1": ob1_p, "ow2": ow2_p.astype(bf16), "ob2": ob2_p,
        "pw1": pw1_p.astype(bf16), "pb1": pb1_p, "pw2": pw2_p.astype(bf16), "pb2": pb2_p,
        "xw1": xw1_p.astype(bf16), "xb1": xb1_p,
        "xw2": xw2_p.astype(bf16), "xb2": xb2_p,
        "lv": lv_p,
    }
    # TODO(synk): on v7x the Din->H weights (ow1, pw1) could be stored fp8 for ~2x MXU
    #             throughput; kept bf16 pending an accuracy check against the f32 reference.


# --------------------------------------------------------- pure-JAX reference

def _reference_forward(params, vfs, obj_visual_d):
    def mlp(x, w1, b1, w2, b2):
        h = jnp.maximum(x @ w1 + b1, 0.0)
        return h @ w2 + b2

    sbj = mlp(vfs[:, :obj_visual_d], *params["obj"])
    obj = mlp(vfs[:, -obj_visual_d:], *params["obj"])
    pre0 = mlp(vfs, *params["pre_in"])
    feat = jnp.concatenate([sbj, pre0, obj], axis=1)
    emb = mlp(feat, *params["pre_ex"])
    lv = params["pre_label_vecs"]
    viol = jnp.maximum(lv[None, :, :] - emb[:, None, :], 0.0)
    scores = -jnp.sum(viol * viol, axis=-1)
    return scores, emb


# -------------------------------------------------------------------- main ---

if __name__ == "__main__":
    # small, self-consistent dims
    B = 4
    obj_visual_d, obj_hidden_d, obj_embedding_d = 16, 32, 24
    pre_visual_d, pre_hidden_d, pre_embedding_d = 48, 32, 20
    n_obj_labels, n_pre_labels = 10, 12

    key = jax.random.PRNGKey(0)
    k_param, k_in = jax.random.split(key)

    params = make_params(k_param, obj_visual_d, obj_hidden_d, obj_embedding_d,
                         pre_visual_d, pre_hidden_d, pre_embedding_d,
                         n_obj_labels, n_pre_labels)
    kp = prepare_kernel_params(params)

    vfs = jax.random.normal(k_in, (B, pre_visual_d), jnp.float32)

    fwd = jax.jit(functools.partial(
        predicate_visual_forward,
        obj_visual_d=obj_visual_d,
        n_labels=n_pre_labels,
        embedding_d=pre_embedding_d))
    all_scores, pre_embedding = fwd(kp, vfs)
    jax.block_until_ready((all_scores, pre_embedding))

    assert all_scores.shape == (B, n_pre_labels)
    assert pre_embedding.shape == (B, pre_embedding_d)
    assert bool(jnp.all(all_scores <= 0.0))  # negative order-violation energies

    # correctness vs pure-JAX f32 reference (kernel uses bf16 MXU operands -> loose tol)
    ref_scores, ref_emb = _reference_forward(params, vfs, obj_visual_d)
    assert bool(jnp.allclose(pre_embedding, ref_emb, rtol=1e-1, atol=1e-1))
    assert bool(jnp.allclose(all_scores, ref_scores, rtol=2e-1, atol=2e-1))

    print("KERNEL_OK")
</pallas_src>

<mosaic_0001>
module attributes {stable_mosaic.version = 11 : i64} {
  func.func @_fused_kernel(%arg0: i32, %arg1: i32, %arg2: memref<8x48xbf16, #tpu.memory_space<vmem>>, %arg3: memref<16x128xbf16, #tpu.memory_space<vmem>>, %arg4: memref<1x128xf32, #tpu.memory_space<vmem>>, %arg5: memref<128x128xbf16, #tpu.memory_space<vmem>>, %arg6: memref<1x128xf32, #tpu.memory_space<vmem>>, %arg7: memref<48x128xbf16, #tpu.memory_space<vmem>>, %arg8: memref<1x128xf32, #tpu.memory_space<vmem>>, %arg9: memref<128x128xbf16, #tpu.memory_space<vmem>>, %arg10: memref<1x128xf32, #tpu.memory_space<vmem>>, %arg11: memref<384x128xbf16, #tpu.memory_space<vmem>>, %arg12: memref<1x128xf32, #tpu.memory_space<vmem>>, %arg13: memref<128x128xbf16, #tpu.memory_space<vmem>>, %arg14: memref<1x128xf32, #tpu.memory_space<vmem>>, %arg15: memref<128x128xf32, #tpu.memory_space<vmem>>, %arg16: memref<8x128xf32, #tpu.memory_space<vmem>>, %arg17: memref<8x128xf32, #tpu.memory_space<vmem>>, %arg18: memref<8x128xf32, #tpu.memory_space<vmem>>) attributes {dimension_semantics = [#tpu.dimension_semantics<parallel>, #tpu.dimension_semantics<arbitrary>], iteration_bounds = array<i64: 1, 1>, scalar_prefetch = 0 : i64, scratch_operands = 1 : i64, tpu.core_type = #tpu.core_type<tc>, window_params = [{transform_indices = @transform_0, window_bounds = array<i64: 8, 48>}, {pipeline_mode = #tpu.pipeline_mode<synchronous>, transform_indices = @transform_1, window_bounds = array<i64: 16, 128>}, {pipeline_mode = #tpu.pipeline_mode<synchronous>, transform_indices = @transform_2, window_bounds = array<i64: 1, 128>}, {pipeline_mode = #tpu.pipeline_mode<synchronous>, transform_indices = @transform_3, window_bounds = array<i64: 128, 128>}, {pipeline_mode = #tpu.pipeline_mode<synchronous>, transform_indices = @transform_4, window_bounds = array<i64: 1, 128>}, {pipeline_mode = #tpu.pipeline_mode<synchronous>, transform_indices = @transform_5, window_bounds = array<i64: 48, 128>}, {pipeline_mode = #tpu.pipeline_mode<synchronous>, transform_indices = @transform_6, window_bounds = array<i64: 1, 128>}, {pipeline_mode = #tpu.pipeline_mode<synchronous>, transform_indices = @transform_7, window_bounds = array<i64: 128, 128>}, {pipeline_mode = #tpu.pipeline_mode<synchronous>, transform_indices = @transform_8, window_bounds = array<i64: 1, 128>}, {pipeline_mode = #tpu.pipeline_mode<synchronous>, transform_indices = @transform_9, window_bounds = array<i64: 384, 128>}, {pipeline_mode = #tpu.pipeline_mode<synchronous>, transform_indices = @transform_10, window_bounds = array<i64: 1, 128>}, {pipeline_mode = #tpu.pipeline_mode<synchronous>, transform_indices = @transform_11, window_bounds = array<i64: 128, 128>}, {pipeline_mode = #tpu.pipeline_mode<synchronous>, transform_indices = @transform_12, window_bounds = array<i64: 1, 128>}, {transform_indices = @transform_13, window_bounds = array<i64: 128, 128>}, {transform_indices = @transform_14, window_bounds = array<i64: 8, 128>}, {transform_indices = @transform_15, window_bounds = array<i64: 8, 128>}]} {
    %c0_i32 = arith.constant 0 : i32
    %0 = arith.cmpi eq, %arg1, %c0_i32 : i32
    %1 = arith.extui %0 : i1 to i32
    %c0_i32_0 = arith.constant 0 : i32
    %2 = arith.cmpi ne, %1, %c0_i32_0 : i32
    scf.if %2 {
      %c0_8 = arith.constant 0 : index
      %c0_9 = arith.constant 0 : index
      %17 = vector.load %arg2[%c0_8, %c0_9] : memref<8x48xbf16, #tpu.memory_space<vmem>>, vector<8x48xbf16>
      %18 = vector.extract_strided_slice %17 {offsets = [0, 0], sizes = [8, 16], strides = [1, 1]} : vector<8x48xbf16> to vector<8x16xbf16>
      %19 = vector.extract_strided_slice %17 {offsets = [0, 32], sizes = [8, 16], strides = [1, 1]} : vector<8x48xbf16> to vector<8x16xbf16>
      %c0_10 = arith.constant 0 : index
      %c0_11 = arith.constant 0 : index
      %20 = vector.load %arg3[%c0_10, %c0_11] : memref<16x128xbf16, #tpu.memory_space<vmem>>, vector<16x128xbf16>
      %cst_12 = arith.constant dense<0.000000e+00> : vector<8x128xf32>
      %21 = tpu.matmul %18, %20, %cst_12 {dimension_numbers = #tpu.dot_dimension_numbers<[1], [0], [0], [1], [0, 0, 1, 1], [], []>} : vector<8x16xbf16>, vector<16x128xbf16>, vector<8x128xf32> -> vector<8x128xf32>
      %c0_13 = arith.constant 0 : index
      %c0_14 = arith.constant 0 : index
      %22 = vector.load %arg4[%c0_13, %c0_14] : memref<1x128xf32, #tpu.memory_space<vmem>>, vector<1x128xf32>
      %23 = vector.broadcast %22 : vector<1x128xf32> to vector<8x128xf32>
      %24 = arith.addf %21, %23 : vector<8x128xf32>
      %cst_15 = arith.constant 0.000000e+00 : f32
      %25 = vector.broadcast %cst_15 : f32 to vector<8x128xf32>
      %26 = arith.maximumf %24, %25 : vector<8x128xf32>
      %27 = arith.truncf %26 : vector<8x128xf32> to vector<8x128xbf16>
      %c0_16 = arith.constant 0 : index
      %c0_17 = arith.constant 0 : index
      %28 = vector.load %arg5[%c0_16, %c0_17] : memref<128x128xbf16, #tpu.memory_space<vmem>>, vector<128x128xbf16>
      %cst_18 = arith.constant dense<0.000000e+00> : vector<8x128xf32>
      %29 = tpu.matmul %27, %28, %cst_18 {dimension_numbers = #tpu.dot_dimension_numbers<[1], [0], [0], [1], [0, 0, 1, 1], [], []>} : vector<8x128xbf16>, vector<128x128xbf16>, vector<8x128xf32> -> vector<8x128xf32>
      %c0_19 = arith.constant 0 : index
      %c0_20 = arith.constant 0 : index
      %30 = vector.load %arg6[%c0_19, %c0_20] : memref<1x128xf32, #tpu.memory_space<vmem>>, vector<1x128xf32>
      %31 = vector.broadcast %30 : vector<1x128xf32> to vector<8x128xf32>
      %32 = arith.addf %29, %31 : vector<8x128xf32>
      %c0_21 = arith.constant 0 : index
      %c0_22 = arith.constant 0 : index
      %33 = vector.load %arg3[%c0_21, %c0_22] : memref<16x128xbf16, #tpu.memory_space<vmem>>, vector<16x128xbf16>
      %cst_23 = arith.constant dense<0.000000e+00> : vector<8x128xf32>
      %34 = tpu.matmul %19, %33, %cst_23 {dimension_numbers = #tpu.dot_dimension_numbers<[1], [0], [0], [1], [0, 0, 1, 1], [], []>} : vector<8x16xbf16>, vector<16x128xbf16>, vector<8x128xf32> -> vector<8x128xf32>
      %c0_24 = arith.constant 0 : index
      %c0_25 = arith.constant 0 : index
      %35 = vector.load %arg4[%c0_24, %c0_25] : memref<1x128xf32, #tpu.memory_space<vmem>>, vector<1x128xf32>
      %36 = vector.broadcast %35 : vector<1x128xf32> to vector<8x128xf32>
      %37 = arith.addf %34, %36 : vector<8x128xf32>
      %cst_26 = arith.constant 0.000000e+00 : f32
      %38 = vector.broadcast %cst_26 : f32 to vector<8x128xf32>
      %39 = arith.maximumf %37, %38 : vector<8x128xf32>
      %40 = arith.truncf %39 : vector<8x128xf32> to vector<8x128xbf16>
      %c0_27 = arith.constant 0 : index
      %c0_28 = arith.constant 0 : index
      %41 = vector.load %arg5[%c0_27, %c0_28] : memref<128x128xbf16, #tpu.memory_space<vmem>>, vector<128x128xbf16>
      %cst_29 = arith.constant dense<0.000000e+00> : vector<8x128xf32>
      %42 = tpu.matmul %40, %41, %cst_29 {dimension_numbers = #tpu.dot_dimension_numbers<[1], [0], [0], [1], [0, 0, 1, 1], [], []>} : vector<8x128xbf16>, vector<128x128xbf16>, vector<8x128xf32> -> vector<8x128xf32>
      %c0_30 = arith.constant 0 : index
      %c0_31 = arith.constant 0 : index
      %43 = vector.load %arg6[%c0_30, %c0_31] : memref<1x128xf32, #tpu.memory_space<vmem>>, vector<1x128xf32>
      %44 = vector.broadcast %43 : vector<1x128xf32> to vector<8x128xf32>
      %45 = arith.addf %42, %44 : vector<8x128xf32>
      %c0_32 = arith.constant 0 : index
      %c0_33 = arith.constant 0 : index
      %46 = vector.load %arg7[%c0_32, %c0_33] : memref<48x128xbf16, #tpu.memory_space<vmem>>, vector<48x128xbf16>
      %cst_34 = arith.constant dense<0.000000e+00> : vector<8x128xf32>
      %47 = tpu.matmul %17, %46, %cst_34 {dimension_numbers = #tpu.dot_dimension_numbers<[1], [0], [0], [1], [0, 0, 1, 1], [], []>} : vector<8x48xbf16>, vector<48x128xbf16>, vector<8x128xf32> -> vector<8x128xf32>
      %c0_35 = arith.constant 0 : index
      %c0_36 = arith.constant 0 : index
      %48 = vector.load %arg8[%c0_35, %c0_36] : memref<1x128xf32, #tpu.memory_space<vmem>>, vector<1x128xf32>
      %49 = vector.broadcast %48 : vector<1x128xf32> to vector<8x128xf32>
      %50 = arith.addf %47, %49 : vector<8x128xf32>
      %cst_37 = arith.constant 0.000000e+00 : f32
      %51 = vector.broadcast %cst_37 : f32 to vector<8x128xf32>
      %52 = arith.maximumf %50, %51 : vector<8x128xf32>
      %53 = arith.truncf %52 : vector<8x128xf32> to vector<8x128xbf16>
      %c0_38 = arith.constant 0 : index
      %c0_39 = arith.constant 0 : index
      %54 = vector.load %arg9[%c0_38, %c0_39] : memref<128x128xbf16, #tpu.memory_space<vmem>>, vector<128x128xbf16>
      %cst_40 = arith.constant dense<0.000000e+00> : vector<8x128xf32>
      %55 = tpu.matmul %53, %54, %cst_40 {dimension_numbers = #tpu.dot_dimension_numbers<[1], [0], [0], [1], [0, 0, 1, 1], [], []>} : vector<8x128xbf16>, vector<128x128xbf16>, vector<8x128xf32> -> vector<8x128xf32>
      %c0_41 = arith.constant 0 : index
      %c0_42 = arith.constant 0 : index
      %56 = vector.load %arg10[%c0_41, %c0_42] : memref<1x128xf32, #tpu.memory_space<vmem>>, vector<1x128xf32>
      %57 = vector.broadcast %56 : vector<1x128xf32> to vector<8x128xf32>
      %58 = arith.addf %55, %57 : vector<8x128xf32>
      %59 = arith.truncf %32 : vector<8x128xf32> to vector<8x128xbf16>
      %60 = arith.truncf %58 : vector<8x128xf32> to vector<8x128xbf16>
      %61 = arith.truncf %45 : vector<8x128xf32> to vector<8x128xbf16>
      %62 = tpu.concatenate %59, %60, %61 in 1 : vector<8x128xbf16>, vector<8x128xbf16>, vector<8x128xbf16> -> vector<8x384xbf16>
      %c0_43 = arith.constant 0 : index
      %c0_44 = arith.constant 0 : index
      %63 = vector.load %arg11[%c0_43, %c0_44] : memref<384x128xbf16, #tpu.memory_space<vmem>>, vector<384x128xbf16>
      %cst_45 = arith.constant dense<0.000000e+00> : vector<8x128xf32>
      %64 = tpu.matmul %62, %63, %cst_45 {dimension_numbers = #tpu.dot_dimension_numbers<[1], [0], [0], [1], [0, 0, 1, 1], [], []>} : vector<8x384xbf16>, vector<384x128xbf16>, vector<8x128xf32> -> vector<8x128xf32>
      %c0_46 = arith.constant 0 : index
      %c0_47 = arith.constant 0 : index
      %65 = vector.load %arg12[%c0_46, %c0_47] : memref<1x128xf32, #tpu.memory_space<vmem>>, vector<1x128xf32>
      %66 = vector.broadcast %65 : vector<1x128xf32> to vector<8x128xf32>
      %67 = arith.addf %64, %66 : vector<8x128xf32>
      %cst_48 = arith.constant 0.000000e+00 : f32
      %68 = vector.broadcast %cst_48 : f32 to vector<8x128xf32>
      %69 = arith.maximumf %67, %68 : vector<8x128xf32>
      %70 = arith.truncf %69 : vector<8x128xf32> to vector<8x128xbf16>
      %c0_49 = arith.constant 0 : index
      %c0_50 = arith.constant 0 : index
      %71 = vector.load %arg13[%c0_49, %c0_50] : memref<128x128xbf16, #tpu.memory_space<vmem>>, vector<128x128xbf16>
      %cst_51 = arith.constant dense<0.000000e+00> : vector<8x128xf32>
      %72 = tpu.matmul %70, %71, %cst_51 {dimension_numbers = #tpu.dot_dimension_numbers<[1], [0], [0], [1], [0, 0, 1, 1], [], []>} : vector<8x128xbf16>, vector<128x128xbf16>, vector<8x128xf32> -> vector<8x128xf32>
      %c0_52 = arith.constant 0 : index
      %c0_53 = arith.constant 0 : index
      %73 = vector.load %arg14[%c0_52, %c0_53] : memref<1x128xf32, #tpu.memory_space<vmem>>, vector<1x128xf32>
      %74 = vector.broadcast %73 : vector<1x128xf32> to vector<8x128xf32>
      %75 = arith.addf %72, %74 : vector<8x128xf32>
      %c0_54 = arith.constant 0 : index
      %c0_55 = arith.constant 0 : index
      %76 = vector.load %arg18[%c0_54, %c0_55] : memref<8x128xf32, #tpu.memory_space<vmem>>, vector<8x128xf32>
      tpu.vector_store %arg18[%c0_54, %c0_55], %75 {strides = array<i32>} : memref<8x128xf32, #tpu.memory_space<vmem>>, vector<8x128xf32>,
      %c0_56 = arith.constant 0 : index
      %c0_57 = arith.constant 0 : index
      %77 = vector.load %arg17[%c0_56, %c0_57] : memref<8x128xf32, #tpu.memory_space<vmem>>, vector<8x128xf32>
      tpu.vector_store %arg17[%c0_56, %c0_57], %75 {strides = array<i32>} : memref<8x128xf32, #tpu.memory_space<vmem>>, vector<8x128xf32>,
    } else {
    }
    %c0 = arith.constant 0 : index
    %c0_1 = arith.constant 0 : index
    %3 = vector.load %arg18[%c0, %c0_1] : memref<8x128xf32, #tpu.memory_space<vmem>>, vector<8x128xf32>
    %c0_2 = arith.constant 0 : index
    %c0_3 = arith.constant 0 : index
    %4 = vector.load %arg15[%c0_2, %c0_3] : memref<128x128xf32, #tpu.memory_space<vmem>>, vector<128x128xf32>
    %5 = vector.shape_cast %4 : vector<128x128xf32> to vector<1x128x128xf32>
    %6 = vector.shape_cast %3 : vector<8x128xf32> to vector<8x1x128xf32>
    %7 = vector.broadcast %5 : vector<1x128x128xf32> to vector<8x128x128xf32>
    %8 = vector.broadcast %6 : vector<8x1x128xf32> to vector<8x128x128xf32>
    %9 = arith.subf %7, %8 : vector<8x128x128xf32>
    %cst = arith.constant 0.000000e+00 : f32
    %10 = vector.broadcast %cst : f32 to vector<8x128x128xf32>
    %11 = arith.maximumf %9, %10 : vector<8x128x128xf32>
    %12 = arith.mulf %11, %11 : vector<8x128x128xf32>
    %cst_4 = arith.constant dense<0.000000e+00> : vector<8x128xf32>
    %13 = vector.multi_reduction <add>, %12, %cst_4 [2] : vector<8x128x128xf32> to vector<8x128xf32>
    %cst_5 = arith.constant 0.000000e+00 : f32
    %14 = vector.broadcast %cst_5 : f32 to vector<8x128xf32>
    %15 = arith.subf %14, %13 : vector<8x128xf32>
    %c0_6 = arith.constant 0 : index
    %c0_7 = arith.constant 0 : index
    %16 = vector.load %arg16[%c0_6, %c0_7] : memref<8x128xf32, #tpu.memory_space<vmem>>, vector<8x128xf32>
    tpu.vector_store %arg16[%c0_6, %c0_7], %15 {strides = array<i32>} : memref<8x128xf32, #tpu.memory_space<vmem>>, vector<8x128xf32>,
    return
  }
  func.func @transform_0(%arg0: i32, %arg1: i32) -> (i32, i32) {
    %c0_i32 = arith.constant 0 : i32
    %c0_i32_0 = arith.constant 0 : i32
    return %arg0, %c0_i32 : i32, i32
  }
  func.func @transform_1(%arg0: i32, %arg1: i32) -> (i32, i32) {
    %c0_i32 = arith.constant 0 : i32
    %c0_i32_0 = arith.constant 0 : i32
    %c0_i32_1 = arith.constant 0 : i32
    return %c0_i32, %c0_i32_0 : i32, i32
  }
  func.func @transform_2(%arg0: i32, %arg1: i32) -> (i32, i32) {
    %c0_i32 = arith.constant 0 : i32
    %c0_i32_0 = arith.constant 0 : i32
    %c0_i32_1 = arith.constant 0 : i32
    return %c0_i32, %c0_i32_0 : i32, i32
  }
  func.func @transform_3(%arg0: i32, %arg1: i32) -> (i32, i32) {
    %c0_i32 = arith.constant 0 : i32
    %c0_i32_0 = arith.constant 0 : i32
    %c0_i32_1 = arith.constant 0 : i32
    return %c0_i32, %c0_i32_0 : i32, i32
  }
  func.func @transform_4(%arg0: i32, %arg1: i32) -> (i32, i32) {
    %c0_i32 = arith.constant 0 : i32
    %c0_i32_0 = arith.constant 0 : i32
    %c0_i32_1 = arith.constant 0 : i32
    return %c0_i32, %c0_i32_0 : i32, i32
  }
  func.func @transform_5(%arg0: i32, %arg1: i32) -> (i32, i32) {
    %c0_i32 = arith.constant 0 : i32
    %c0_i32_0 = arith.constant 0 : i32
    %c0_i32_1 = arith.constant 0 : i32
    return %c0_i32, %c0_i32_0 : i32, i32
  }
  func.func @transform_6(%arg0: i32, %arg1: i32) -> (i32, i32) {
    %c0_i32 = arith.constant 0 : i32
    %c0_i32_0 = arith.constant 0 : i32
    %c0_i32_1 = arith.constant 0 : i32
    return %c0_i32, %c0_i32_0 : i32, i32
  }
  func.func @transform_7(%arg0: i32, %arg1: i32) -> (i32, i32) {
    %c0_i32 = arith.constant 0 : i32
    %c0_i32_0 = arith.constant 0 : i32
    %c0_i32_1 = arith.constant 0 : i32
    return %c0_i32, %c0_i32_0 : i32, i32
  }
  func.func @transform_8(%arg0: i32, %arg1: i32) -> (i32, i32) {
    %c0_i32 = arith.constant 0 : i32
    %c0_i32_0 = arith.constant 0 : i32
    %c0_i32_1 = arith.constant 0 : i32
    return %c0_i32, %c0_i32_0 : i32, i32
  }
  func.func @transform_9(%arg0: i32, %arg1: i32) -> (i32, i32) {
    %c0_i32 = arith.constant 0 : i32
    %c0_i32_0 = arith.constant 0 : i32
    %c0_i32_1 = arith.constant 0 : i32
    return %c0_i32, %c0_i32_0 : i32, i32
  }
  func.func @transform_10(%arg0: i32, %arg1: i32) -> (i32, i32) {
    %c0_i32 = arith.constant 0 : i32
    %c0_i32_0 = arith.constant 0 : i32
    %c0_i32_1 = arith.constant 0 : i32
    return %c0_i32, %c0_i32_0 : i32, i32
  }
  func.func @transform_11(%arg0: i32, %arg1: i32) -> (i32, i32) {
    %c0_i32 = arith.constant 0 : i32
    %c0_i32_0 = arith.constant 0 : i32
    %c0_i32_1 = arith.constant 0 : i32
    return %c0_i32, %c0_i32_0 : i32, i32
  }
  func.func @transform_12(%arg0: i32, %arg1: i32) -> (i32, i32) {
    %c0_i32 = arith.constant 0 : i32
    %c0_i32_0 = arith.constant 0 : i32
    %c0_i32_1 = arith.constant 0 : i32
    return %c0_i32, %c0_i32_0 : i32, i32
  }
  func.func @transform_13(%arg0: i32, %arg1: i32) -> (i32, i32) {
    %c0_i32 = arith.constant 0 : i32
    %c0_i32_0 = arith.constant 0 : i32
    return %arg1, %c0_i32 : i32, i32
  }
  func.func @transform_14(%arg0: i32, %arg1: i32) -> (i32, i32) {
    %c0_i32 = arith.constant 0 : i32
    return %arg0, %arg1 : i32, i32
  }
  func.func @transform_15(%arg0: i32, %arg1: i32) -> (i32, i32) {
    %c0_i32 = arith.constant 0 : i32
    %c0_i32_0 = arith.constant 0 : i32
    return %arg0, %c0_i32 : i32, i32
  }
}

</mosaic_0001>

<llo_original>
// kernel: predicate_visual_forward.1
$region0: #{predicate_visual_forward.1}
  #allocation0 [shape = 'u32[]', space=smem, size = 0x4, offset = 0x4, fixed_abs, tag = 'smem constant byte address 0x4 - core index']
  #allocation1 [shape = 'u32[144,128]{1,0:T(1,128)}', space=vmem, size = 0x12000, scoped, tag = 'internal scratch']
  #allocation2 [shape = 'f32[8,128]{1,0:T(8,128)}', space=vmem, size = 0x1000, scoped, tag = 'scratch operand']
  %s0 = inlined_call_operand.vmem [shape: bf16[8,48], index: 0, kind: input, shape index: {}]
  %s1 = inlined_call_operand.vmem [shape: bf16[16,128], index: 1, kind: input, shape index: {}]
  %s2 = inlined_call_operand.vmem [shape: f32[1,128], index: 2, kind: input, shape index: {}]
  %s3 = inlined_call_operand.hbm [shape: bf16[128,128], index: 3, kind: input, shape index: {}]
  %s4 = inlined_call_operand.vmem [shape: f32[1,128], index: 4, kind: input, shape index: {}]
  %s5 = inlined_call_operand.vmem [shape: bf16[48,128], index: 5, kind: input, shape index: {}]
  %s6 = inlined_call_operand.vmem [shape: f32[1,128], index: 6, kind: input, shape index: {}]
  %s7 = inlined_call_operand.hbm [shape: bf16[128,128], index: 7, kind: input, shape index: {}]
  %s8 = inlined_call_operand.vmem [shape: f32[1,128], index: 8, kind: input, shape index: {}]
  %s9 = inlined_call_operand.hbm [shape: bf16[384,128], index: 9, kind: input, shape index: {}]
  %s10 = inlined_call_operand.vmem [shape: f32[1,128], index: 10, kind: input, shape index: {}]
  %s11 = inlined_call_operand.hbm [shape: bf16[128,128], index: 11, kind: input, shape index: {}]
  %s12 = inlined_call_operand.vmem [shape: f32[1,128], index: 12, kind: input, shape index: {}]
  %s13 = inlined_call_operand.hbm [shape: f32[128,128], index: 13, kind: input, shape index: {}]
  %s14 = inlined_call_operand.vmem [shape: f32[8,128], index: 14, kind: output, shape index: {0}]
  %s15 = inlined_call_operand.vmem [shape: f32[8,128], index: 15, kind: output, shape index: {1}]
  %16 = xla_tuple %s14, %s15
  %s17 = sld [smem:[#allocation0]]
  $region98: #{predicate_visual_forward.1} parent=0
    _
  %s19 = ssub.s32 1, %s17
  %s20 = scalar_select 0, %s19, %s17
  $region1: #{predicate_visual_forward.1} parent=0
    #allocation3 [shape = 'u8[32768]{0}', space=vmem, size = 0x8000, scoped, tag = 'input window, operand 3, single buffered']
    #allocation4 [shape = 's32[1]{0}', space=sflag, size = 0x4, scoped, tag = 'scoped memory for predicate_visual_forward.1']
    #allocation5 [shape = 'u8[32768]{0}', space=vmem, size = 0x8000, scoped, tag = 'input window, operand 7, single buffered']
    #allocation6 [shape = 's32[1]{0}', space=sflag, size = 0x4, scoped, tag = 'scoped memory for predicate_visual_forward.1']
    #allocation7 [shape = 'u8[98304]{0}', space=vmem, size = 0x18000, scoped, tag = 'input window, operand 9, single buffered']
    #allocation8 [shape = 'u8[32768]{0}', space=vmem, size = 0x8000, scoped, tag = 'input window, operand 11, single buffered']
    #allocation9 [shape = 's32[1]{0}', space=sflag, size = 0x4, scoped, tag = 'scoped memory for predicate_visual_forward.1']
    #allocation10 [shape = 'u8[65536]{0}', space=vmem, size = 0x10000, scoped, tag = 'input window, operand 13, single buffered']
    %21 = vsyncpa [#allocation4], 0
    %22 = vsyncpa [#allocation6], 0
    %23 = vsyncpa [#allocation9], 0
    // Predicated region
    $region2: #{predicate_visual_forward.1} parent=1 // pred_check
      _
    $region3: #{predicate_visual_forward.1} parent=1 // pred_check_branch
      %25 = sbr.rel (0) target = $region5
    $region4: #{predicate_visual_forward.1} parent=1 // pred_region
      _
    $region5: #{predicate_visual_forward.1} parent=1 // pred_fallthru
      _
    // Predicated region
    $region6: #{predicate_visual_forward.1} parent=1 // pred_check
      _
    $region7: #{predicate_visual_forward.1} parent=1 // pred_check_branch
      %27 = sbr.rel (0) target = $region9
    $region8: #{predicate_visual_forward.1} parent=1 // pred_region
      _
    $region9: #{predicate_visual_forward.1} parent=1 // pred_fallthru
      _
    // Predicated region
    $region10: #{predicate_visual_forward.1} parent=1 // pred_check
      _
    $region11: #{predicate_visual_forward.1} parent=1 // pred_check_branch
      %29 = sbr.rel (0) target = $region13
    $region12: #{predicate_visual_forward.1} parent=1 // pred_region
      _
    $region13: #{predicate_visual_forward.1} parent=1 // pred_fallthru
      _
    // Predicated region
    $region14: #{predicate_visual_forward.1} parent=1 // pred_check
      _
    $region15: #{predicate_visual_forward.1} parent=1 // pred_check_branch
      %31 = sbr.rel (0) target = $region17
    $region16: #{predicate_visual_forward.1} parent=1 // pred_region
      %s33 = ssub.s32 1024, 1024
      %34 = vsyncadd [#allocation4], %s33
      %s35 = sshll.u32 [#allocation3], 4
      %s36 = int_to_ptr.vmem [resolvable:$true] %s35
      %41 = dma.hbm_to_vmem [thread:$0]  %s3, 1024, %s36, [#allocation4], 64, 64, 4
    $region17: #{predicate_visual_forward.1} parent=1 // pred_fallthru
      _
    // Predicated region
    $region18: #{predicate_visual_forward.1} parent=1 // pred_check
      _
    $region19: #{predicate_visual_forward.1} parent=1 // pred_check_branch
      %43 = sbr.rel (0) target = $region21
    $region20: #{predicate_visual_forward.1} parent=1 // pred_region
      _
    $region21: #{predicate_visual_forward.1} parent=1 // pred_fallthru
      _
    // Predicated region
    $region22: #{predicate_visual_forward.1} parent=1 // pred_check
      _
    $region23: #{predicate_visual_forward.1} parent=1 // pred_check_branch
      %45 = sbr.rel (0) target = $region25
    $region24: #{predicate_visual_forward.1} parent=1 // pred_region
      _
    $region25: #{predicate_visual_forward.1} parent=1 // pred_fallthru
      _
    // Predicated region
    $region26: #{predicate_visual_forward.1} parent=1 // pred_check
      _
    $region27: #{predicate_visual_forward.1} parent=1 // pred_check_branch
      %47 = sbr.rel (0) target = $region29
    $region28: #{predicate_visual_forward.1} parent=1 // pred_region
      _
    $region29: #{predicate_visual_forward.1} parent=1 // pred_fallthru
      _
    // Predicated region
    $region30: #{predicate_visual_forward.1} parent=1 // pred_check
      _
    $region31: #{predicate_visual_forward.1} parent=1 // pred_check_branch
      %49 = sbr.rel (0) target = $region33
    $region32: #{predicate_visual_forward.1} parent=1 // pred_region
      %s51 = ssub.s32 1024, 1024
      %52 = vsyncadd [#allocation6], %s51
      %s53 = sshll.u32 [#allocation5], 4
      %s54 = int_to_ptr.vmem [resolvable:$true] %s53
      %59 = dma.hbm_to_vmem [thread:$0]  %s7, 1024, %s54, [#allocation6], 64, 64, 4
    $region33: #{predicate_visual_forward.1} parent=1 // pred_fallthru
      _
    // Predicated region
    $region34: #{predicate_visual_forward.1} parent=1 // pred_check
      _
    $region35: #{predicate_visual_forward.1} parent=1 // pred_check_branch
      %61 = sbr.rel (0) target = $region37
    $region36: #{predicate_visual_forward.1} parent=1 // pred_region
      _
    $region37: #{predicate_visual_forward.1} parent=1 // pred_fallthru
      _
    // Predicated region
    $region38: #{predicate_visual_forward.1} parent=1 // pred_check
      _
    $region39: #{predicate_visual_forward.1} parent=1 // pred_check_branch
      %63 = sbr.rel (0) target = $region41
    $region40: #{predicate_visual_forward.1} parent=1 // pred_region
      %s65 = ssub.s32 3072, 3072
      %66 = vsyncadd [#allocation6], %s65
      %s67 = sshll.u32 [#allocation7], 4
      %s68 = int_to_ptr.vmem [resolvable:$true] %s67
      %73 = dma.hbm_to_vmem [thread:$0]  %s9, 3072, %s68, [#allocation6], 64, 64, 4
    $region41: #{predicate_visual_forward.1} parent=1 // pred_fallthru
      _
    // Predicated region
    $region42: #{predicate_visual_forward.1} parent=1 // pred_check
      _
    $region43: #{predicate_visual_forward.1} parent=1 // pred_check_branch
      %75 = sbr.rel (0) target = $region45
    $region44: #{predicate_visual_forward.1} parent=1 // pred_region
      _
    $region45: #{predicate_visual_forward.1} parent=1 // pred_fallthru
      _
    // Predicated region
    $region46: #{predicate_visual_forward.1} parent=1 // pred_check
      _
    $region47: #{predicate_visual_forward.1} parent=1 // pred_check_branch
      %77 = sbr.rel (0) target = $region49
    $region48: #{predicate_visual_forward.1} parent=1 // pred_region
      %s79 = ssub.s32 1024, 1024
      %80 = vsyncadd [#allocation9], %s79
      %s81 = sshll.u32 [#allocation8], 4
      %s82 = int_to_ptr.vmem [resolvable:$true] %s81
      %87 = dma.hbm_to_vmem [thread:$0]  %s11, 1024, %s82, [#allocation9], 64, 64, 4
    $region49: #{predicate_visual_forward.1} parent=1 // pred_fallthru
      _
    // Predicated region
    $region50: #{predicate_visual_forward.1} parent=1 // pred_check
      _
    $region51: #{predicate_visual_forward.1} parent=1 // pred_check_branch
      %89 = sbr.rel (0) target = $region53
    $region52: #{predicate_visual_forward.1} parent=1 // pred_region
      _
    $region53: #{predicate_visual_forward.1} parent=1 // pred_fallthru
      _
    // Predicated region
    $region54: #{predicate_visual_forward.1} parent=1 // pred_check
      _
    $region55: #{predicate_visual_forward.1} parent=1 // pred_check_branch
      %91 = sbr.rel (0) target = $region57
    $region56: #{predicate_visual_forward.1} parent=1 // pred_region
      %s93 = ssub.s32 2048, 2048
      %94 = vsyncadd [#allocation9], %s93
      %s95 = sshll.u32 [#allocation10], 4
      %s96 = int_to_ptr.vmem [resolvable:$true] %s95
      %101 = dma.hbm_to_vmem [thread:$0]  %s13, 2048, %s96, [#allocation9], 128, 128, 8
    $region57: #{predicate_visual_forward.1} parent=1 // pred_fallthru
      _
    // Predicated region
    $region58: #{predicate_visual_forward.1} parent=1 // pred_check
      _
    $region59: #{predicate_visual_forward.1} parent=1 // pred_check_branch
      %103 = sbr.rel (0) target = $region61
    $region60: #{predicate_visual_forward.1} parent=1 // pred_region
      %104 = dma.done [#allocation4], 1024
    $region61: #{predicate_visual_forward.1} parent=1 // pred_fallthru
      _
    // Predicated region
    $region62: #{predicate_visual_forward.1} parent=1 // pred_check
      _
    $region63: #{predicate_visual_forward.1} parent=1 // pred_check_branch
      %106 = sbr.rel (0) target = $region65
    $region64: #{predicate_visual_forward.1} parent=1 // pred_region
      %107 = dma.done [#allocation6], 1024
    $region65: #{predicate_visual_forward.1} parent=1 // pred_fallthru
      _
    // Predicated region
    $region66: #{predicate_visual_forward.1} parent=1 // pred_check
      _
    $region67: #{predicate_visual_forward.1} parent=1 // pred_check_branch
      %109 = sbr.rel (0) target = $region69
    $region68: #{predicate_visual_forward.1} parent=1 // pred_region
      %110 = dma.done [#allocation6], 3072
    $region69: #{predicate_visual_forward.1} parent=1 // pred_fallthru
      _
    // Predicated region
    $region70: #{predicate_visual_forward.1} parent=1 // pred_check
      _
    $region71: #{predicate_visual_forward.1} parent=1 // pred_check_branch
      %112 = sbr.rel (0) target = $region73
    $region72: #{predicate_visual_forward.1} parent=1 // pred_region
      %113 = dma.done [#allocation9], 1024
    $region73: #{predicate_visual_forward.1} parent=1 // pred_fallthru
      _
    // Predicated region
    $region74: #{predicate_visual_forward.1} parent=1 // pred_check
      _
    $region75: #{predicate_visual_forward.1} parent=1 // pred_check_branch
      %115 = sbr.rel (0) target = $region77
    $region76: #{predicate_visual_forward.1} parent=1 // pred_region
      %116 = dma.done [#allocation9], 2048
    $region77: #{predicate_visual_forward.1} parent=1 // pred_fallthru
      _
    %p118 = scmp.eq.s32.totalorder 0, 0
    // Predicated region
    $region78: #{predicate_visual_forward.1} parent=1 // pred_check
      %p119 = pneg %p118
    $region79: #{predicate_visual_forward.1} parent=1 // pred_check_branch
      %121 = sbr.rel (%p119) target = $region81
    $region80: #{predicate_visual_forward.1} parent=1 // pred_region
      %v122 = vld [vmem:[%s0] sm:$0xf]
      %v123 = vld [vmem:[%s1] sm:$0xf]
      %v124 = vld [vmem:[%s1 + $0x4] sm:$0xf]
      %v125 = vld [vmem:[%s2] sm:$0x1]
      %v127 = vlaneseq
      %v128 = vshrl.u32 %v127, 7
      %v129 = vsub.s32 0, %v128
      %v130 = vrot.slane %v125, %v129
      %v134 = vunpack.c.l.b16 %v123
      %v135 = vunpack.c.l.b16 %v124
      %v136 = vpack.c.b16 %v135, %v134
      %vm138 = vcmask 130048
      %v140 = vsel %vm138, %v122, 0
      %142 = vmatprep.subr.bf16.mxu0 0
      %143 = vmatpush1.bf16.msra.mxu0 %v136
      %144 = vmatprep.subr.bf16.mxu0 0
      %145 = vmatpush1.bf16.msra.mxu0 0
      %146 = vmatprep.subr.bf16.mxu0 0
      %147 = vmatpush1.bf16.msra.mxu0 0
      %148 = vmatprep.subr.bf16.mxu0 0
      %149 = vmatpush1.bf16.msra.mxu0 0
      %150 = vmatprep.subr.bf16.mxu0 0
      %151 = vmatpush1.bf16.msra.mxu0 0
      %152 = vmatprep.subr.bf16.mxu0 0
      %153 = vmatpush1.bf16.msra.mxu0 0
      %154 = vmatprep.subr.bf16.mxu0 0
      %155 = vmatpush1.bf16.msra.mxu0 0
      %156 = vmatprep.subr.bf16.mxu0 0
      %157 = vmatpush1.bf16.msra.mxu0 0
      %158 = vmatprep.subr.bf16.mxu0 0
      %159 = vmatpush1.bf16.msra.mxu0 0
      %160 = vmatprep.subr.bf16.mxu0 0
      %161 = vmatpush1.bf16.msra.mxu0 0
      %162 = vmatprep.subr.bf16.mxu0 0
      %163 = vmatpush1.bf16.msra.mxu0 0
      %164 = vmatprep.subr.bf16.mxu0 0
      %165 = vmatpush1.bf16.msra.mxu0 0
      %166 = vmatprep.subr.bf16.mxu0 0
      %167 = vmatpush1.bf16.msra.mxu0 0
      %168 = vmatprep.subr.bf16.mxu0 0
      %169 = vmatpush1.bf16.msra.mxu0 0
      %170 = vmatprep.subr.bf16.mxu0 0
      %171 = vmatpush1.bf16.msra.mxu0 0
      %172 = vmatprep.subr.bf16.mxu0 0
      %173 = vmatpush1.bf16.msra.mxu0 0
      %174 = vmatprep.mubr.bf16.mxu0 0
      %175 = vmatmul.mubr.bf16.gmra.mrb[0].mxu0 %v140
      %v176 = vpop.f32.mrb[0].mxu0
      %v177 = vadd.f32 %v130, %v176
      %v178 = vpop.f32.mrb[0].mxu0
      %v179 = vpop.f32.mrb[0].mxu0
      %v180 = vpop.f32.mrb[0].mxu0
      %181 = vdwg.mxu0
      %v182 = vmax.f32 %v177, 0.0
      %v183 = vpack.c.bf16 %v182, %v182
      %v184 = vld [vmem:[#allocation3] sm:$0xf]
      %v185 = vld [vmem:[#allocation3 + $0x4] sm:$0xf]
      %v186 = vld [vmem:[#allocation3 + $0x8] sm:$0xf]
      %v187 = vld [vmem:[#allocation3 + $0xc] sm:$0xf]
      %v188 = vld [vmem:[#allocation3 + $0x10] sm:$0xf]
      %v189 = vld [vmem:[#allocation3 + $0x14] sm:$0xf]
      %v190 = vld [vmem:[#allocation3 + $0x18] sm:$0xf]
      %v191 = vld [vmem:[#allocation3 + $0x1c] sm:$0xf]
      %v192 = vld [vmem:[#allocation3 + $0x20] sm:$0xf]
      %v193 = vld [vmem:[#allocation3 + $0x24] sm:$0xf]
      %v194 = vld [vmem:[#allocation3 + $0x28] sm:$0xf]
      %v195 = vld [vmem:[#allocation3 + $0x2c] sm:$0xf]
      %v196 = vld [vmem:[#allocation3 + $0x30] sm:$0xf]
      %v197 = vld [vmem:[#allocation3 + $0x34] sm:$0xf]
      %v198 = vld [vmem:[#allocation3 + $0x38] sm:$0xf]
      %v199 = vld [vmem:[#allocation3 + $0x3c] sm:$0xf]
      %v200 = vld [vmem:[%s4] sm:$0x1]
      %v202 = vlaneseq
      %v203 = vshrl.u32 %v202, 7
      %v204 = vsub.s32 0, %v203
      %v205 = vrot.slane %v200, %v204
      %v223 = vunpack.c.l.b16 %v184
      %v224 = vunpack.c.l.b16 %v185
      %v225 = vunpack.c.l.b16 %v186
      %v226 = vunpack.c.l.b16 %v187
      %v227 = vunpack.c.l.b16 %v188
      %v228 = vunpack.c.l.b16 %v189
      %v229 = vunpack.c.l.b16 %v190
      %v230 = vunpack.c.l.b16 %v191
      %v231 = vunpack.c.l.b16 %v192
      %v232 = vunpack.c.l.b16 %v193
      %v233 = vunpack.c.l.b16 %v194
      %v234 = vunpack.c.l.b16 %v195
      %v235 = vunpack.c.l.b16 %v196
      %v236 = vunpack.c.l.b16 %v197
      %v237 = vunpack.c.l.b16 %v198
      %v238 = vunpack.c.l.b16 %v199
      %v239 = vpack.c.b16 %v224, %v223
      %v240 = vpack.c.b16 %v226, %v225
      %v241 = vpack.c.b16 %v228, %v227
      %v242 = vpack.c.b16 %v230, %v229
      %v243 = vpack.c.b16 %v232, %v231
      %v244 = vpack.c.b16 %v234, %v233
      %v245 = vpack.c.b16 %v236, %v235
      %v246 = vpack.c.b16 %v238, %v237
      %255 = vmatprep.subr.bf16.mxu0 0
      %256 = vmatpush1.bf16.msra.mxu0 %v239
      %257 = vmatprep.subr.bf16.mxu0 0
      %258 = vmatpush1.bf16.msra.mxu0 %v240
      %259 = vmatprep.subr.bf16.mxu0 0
      %260 = vmatpush1.bf16.msra.mxu0 %v241
      %261 = vmatprep.subr.bf16.mxu0 0
      %262 = vmatpush1.bf16.msra.mxu0 %v242
      %263 = vmatprep.subr.bf16.mxu0 0
      %264 = vmatpush1.bf16.msra.mxu0 %v243
      %265 = vmatprep.subr.bf16.mxu0 0
      %266 = vmatpush1.bf16.msra.mxu0 %v244
      %267 = vmatprep.subr.bf16.mxu0 0
      %268 = vmatpush1.bf16.msra.mxu0 %v245
      %269 = vmatprep.subr.bf16.mxu0 0
      %270 = vmatpush1.bf16.msra.mxu0 %v246
      %271 = vmatprep.subr.bf16.mxu0 0
      %272 = vmatpush1.bf16.msra.mxu0 0
      %273 = vmatprep.subr.bf16.mxu0 0
      %274 = vmatpush1.bf16.msra.mxu0 0
      %275 = vmatprep.subr.bf16.mxu0 0
      %276 = vmatpush1.bf16.msra.mxu0 0
      %277 = vmatprep.subr.bf16.mxu0 0
      %278 = vmatpush1.bf16.msra.mxu0 0
      %279 = vmatprep.subr.bf16.mxu0 0
      %280 = vmatpush1.bf16.msra.mxu0 0
      %281 = vmatprep.subr.bf16.mxu0 0
      %282 = vmatpush1.bf16.msra.mxu0 0
      %283 = vmatprep.subr.bf16.mxu0 0
      %284 = vmatpush1.bf16.msra.mxu0 0
      %285 = vmatprep.subr.bf16.mxu0 0
      %286 = vmatpush1.bf16.msra.mxu0 0
      %287 = vmatprep.mubr.bf16.mxu0 0
      %288 = vmatmul.mubr.bf16.gmra.mrb[0].mxu0 %v183
      %v289 = vpop.f32.mrb[0].mxu0
      %v290 = vadd.f32 %v205, %v289
      %v291 = vpop.f32.mrb[0].mxu0
      %v292 = vpop.f32.mrb[0].mxu0
      %v293 = vpop.f32.mrb[0].mxu0
      %294 = vdwg.mxu0
      %v296 = vunpack.c.l.b16 %v122
      %v297 = vpack.c.b16 %v296, %v296
      %298 = vrot.lane.b32.xlu0 %v297, 96
      %v299 = vpop.permute.xlu0 %298
      %v301 = vsel %vm138, %v299, 0
      %303 = vmatprep.subr.bf16.mxu0 0
      %304 = vmatpush1.bf16.msra.mxu0 %v136
      %305 = vmatprep.subr.bf16.mxu0 0
      %306 = vmatpush1.bf16.msra.mxu0 0
      %307 = vmatprep.subr.bf16.mxu0 0
      %308 = vmatpush1.bf16.msra.mxu0 0
      %309 = vmatprep.subr.bf16.mxu0 0
      %310 = vmatpush1.bf16.msra.mxu0 0
      %311 = vmatprep.subr.bf16.mxu0 0
      %312 = vmatpush1.bf16.msra.mxu0 0
      %313 = vmatprep.subr.bf16.mxu0 0
      %314 = vmatpush1.bf16.msra.mxu0 0
      %315 = vmatprep.subr.bf16.mxu0 0
      %316 = vmatpush1.bf16.msra.mxu0 0
      %317 = vmatprep.subr.bf16.mxu0 0
      %318 = vmatpush1.bf16.msra.mxu0 0
      %319 = vmatprep.subr.bf16.mxu0 0
      %320 = vmatpush1.bf16.msra.mxu0 0
      %321 = vmatprep.subr.bf16.mxu0 0
      %322 = vmatpush1.bf16.msra.mxu0 0
      %323 = vmatprep.subr.bf16.mxu0 0
      %324 = vmatpush1.bf16.msra.mxu0 0
      %325 = vmatprep.subr.bf16.mxu0 0
      %326 = vmatpush1.bf16.msra.mxu0 0
      %327 = vmatprep.subr.bf16.mxu0 0
      %328 = vmatpush1.bf16.msra.mxu0 0
      %329 = vmatprep.subr.bf16.mxu0 0
      %330 = vmatpush1.bf16.msra.mxu0 0
      %331 = vmatprep.subr.bf16.mxu0 0
      %332 = vmatpush1.bf16.msra.mxu0 0
      %333 = vmatprep.subr.bf16.mxu0 0
      %334 = vmatpush1.bf16.msra.mxu0 0
      %335 = vmatprep.mubr.bf16.mxu0 0
      %336 = vmatmul.mubr.bf16.gmra.mrb[0].mxu0 %v301
      %v337 = vpop.f32.mrb[0].mxu0
      %v338 = vadd.f32 %v130, %v337
      %v339 = vpop.f32.mrb[0].mxu0
      %v340 = vpop.f32.mrb[0].mxu0
      %v341 = vpop.f32.mrb[0].mxu0
      %342 = vdwg.mxu0
      %v343 = vmax.f32 %v338, 0.0
      %v344 = vpack.c.bf16 %v343, %v343
      %345 = vmatprep.subr.bf16.mxu0 0
      %346 = vmatpush1.bf16.msra.mxu0 %v239
      %347 = vmatprep.subr.bf16.mxu0 0
      %348 = vmatpush1.bf16.msra.mxu0 %v240
      %349 = vmatprep.subr.bf16.mxu0 0
      %350 = vmatpush1.bf16.msra.mxu0 %v241
      %351 = vmatprep.subr.bf16.mxu0 0
      %352 = vmatpush1.bf16.msra.mxu0 %v242
      %353 = vmatprep.subr.bf16.mxu0 0
      %354 = vmatpush1.bf16.msra.mxu0 %v243
      %355 = vmatprep.subr.bf16.mxu0 0
      %356 = vmatpush1.bf16.msra.mxu0 %v244
      %357 = vmatprep.subr.bf16.mxu0 0
      %358 = vmatpush1.bf16.msra.mxu0 %v245
      %359 = vmatprep.subr.bf16.mxu0 0
      %360 = vmatpush1.bf16.msra.mxu0 %v246
      %361 = vmatprep.subr.bf16.mxu0 0
      %362 = vmatpush1.bf16.msra.mxu0 0
      %363 = vmatprep.subr.bf16.mxu0 0
      %364 = vmatpush1.bf16.msra.mxu0 0
      %365 = vmatprep.subr.bf16.mxu0 0
      %366 = vmatpush1.bf16.msra.mxu0 0
      %367 = vmatprep.subr.bf16.mxu0 0
      %368 = vmatpush1.bf16.msra.mxu0 0
      %369 = vmatprep.subr.bf16.mxu0 0
      %370 = vmatpush1.bf16.msra.mxu0 0
      %371 = vmatprep.subr.bf16.mxu0 0
      %372 = vmatpush1.bf16.msra.mxu0 0
      %373 = vmatprep.subr.bf16.mxu0 0
      %374 = vmatpush1.bf16.msra.mxu0 0
      %375 = vmatprep.subr.bf16.mxu0 0
      %376 = vmatpush1.bf16.msra.mxu0 0
      %377 = vmatprep.mubr.bf16.mxu0 0
      %378 = vmatmul.mubr.bf16.gmra.mrb[0].mxu0 %v344
      %v379 = vpop.f32.mrb[0].mxu0
      %v380 = vadd.f32 %v205, %v379
      %v381 = vpop.f32.mrb[0].mxu0
      %v382 = vpop.f32.mrb[0].mxu0
      %v383 = vpop.f32.mrb[0].mxu0
      %384 = vdwg.mxu0
      %v385 = vld [vmem:[%s5] sm:$0xf]
      %v386 = vld [vmem:[%s5 + $0x4] sm:$0xf]
      %v387 = vld [vmem:[%s5 + $0x8] sm:$0xf]
      %v388 = vld [vmem:[%s5 + $0xc] sm:$0xf]
      %v389 = vld [vmem:[%s5 + $0x10] sm:$0xf]
      %v390 = vld [vmem:[%s5 + $0x14] sm:$0xf]
      %v391 = vld [vmem:[%s6] sm:$0x1]
      %v393 = vlaneseq
      %v394 = vshrl.u32 %v393, 7
      %v395 = vsub.s32 0, %v394
      %v396 = vrot.slane %v391, %v395
      %v404 = vunpack.c.l.b16 %v385
      %v405 = vunpack.c.l.b16 %v386
      %v406 = vunpack.c.l.b16 %v387
      %v407 = vunpack.c.l.b16 %v388
      %v408 = vunpack.c.l.b16 %v389
      %v409 = vunpack.c.l.b16 %v390
      %v410 = vpack.c.b16 %v405, %v404
      %v411 = vpack.c.b16 %v407, %v406
      %v412 = vpack.c.b16 %v409, %v408
      %vm416 = vcmask 392192
      %v417 = vsel %vm416, %v122, 0
      %419 = vmatprep.subr.bf16.mxu0 0
      %420 = vmatpush1.bf16.msra.mxu0 %v410
      %421 = vmatprep.subr.bf16.mxu0 0
      %422 = vmatpush1.bf16.msra.mxu0 %v411
      %423 = vmatprep.subr.bf16.mxu0 0
      %424 = vmatpush1.bf16.msra.mxu0 %v412
      %425 = vmatprep.subr.bf16.mxu0 0
      %426 = vmatpush1.bf16.msra.mxu0 0
      %427 = vmatprep.subr.bf16.mxu0 0
      %428 = vmatpush1.bf16.msra.mxu0 0
      %429 = vmatprep.subr.bf16.mxu0 0
      %430 = vmatpush1.bf16.msra.mxu0 0
      %431 = vmatprep.subr.bf16.mxu0 0
      %432 = vmatpush1.bf16.msra.mxu0 0
      %433 = vmatprep.subr.bf16.mxu0 0
      %434 = vmatpush1.bf16.msra.mxu0 0
      %435 = vmatprep.subr.bf16.mxu0 0
      %436 = vmatpush1.bf16.msra.mxu0 0
      %437 = vmatprep.subr.bf16.mxu0 0
      %438 = vmatpush1.bf16.msra.mxu0 0
      %439 = vmatprep.subr.bf16.mxu0 0
      %440 = vmatpush1.bf16.msra.mxu0 0
      %441 = vmatprep.subr.bf16.mxu0 0
      %442 = vmatpush1.bf16.msra.mxu0 0
      %443 = vmatprep.subr.bf16.mxu0 0
      %444 = vmatpush1.bf16.msra.mxu0 0
      %445 = vmatprep.subr.bf16.mxu0 0
      %446 = vmatpush1.bf16.msra.mxu0 0
      %447 = vmatprep.subr.bf16.mxu0 0
      %448 = vmatpush1.bf16.msra.mxu0 0
      %449 = vmatprep.subr.bf16.mxu0 0
      %450 = vmatpush1.bf16.msra.mxu0 0
      %451 = vmatprep.mubr.bf16.mxu0 0
      %452 = vmatmul.mubr.bf16.gmra.mrb[0].mxu0 %v417
      %v453 = vpop.f32.mrb[0].mxu0
      %v454 = vadd.f32 %v396, %v453
      %v455 = vpop.f32.mrb[0].mxu0
      %v456 = vpop.f32.mrb[0].mxu0
      %v457 = vpop.f32.mrb[0].mxu0
      %458 = vdwg.mxu0
      %v459 = vmax.f32 %v454, 0.0
      %v460 = vpack.c.bf16 %v459, %v459
      %v461 = vld [vmem:[#allocation5] sm:$0xf]
      %v462 = vld [vmem:[#allocation5 + $0x4] sm:$0xf]
      %v463 = vld [vmem:[#allocation5 + $0x8] sm:$0xf]
      %v464 = vld [vmem:[#allocation5 + $0xc] sm:$0xf]
      %v465 = vld [vmem:[#allocation5 + $0x10] sm:$0xf]
      %v466 = vld [vmem:[#allocation5 + $0x14] sm:$0xf]
      %v467 = vld [vmem:[#allocation5 + $0x18] sm:$0xf]
      %v468 = vld [vmem:[#allocation5 + $0x1c] sm:$0xf]
      %v469 = vld [vmem:[#allocation5 + $0x20] sm:$0xf]
      %v470 = vld [vmem:[#allocation5 + $0x24] sm:$0xf]
      %v471 = vld [vmem:[#allocation5 + $0x28] sm:$0xf]
      %v472 = vld [vmem:[#allocation5 + $0x2c] sm:$0xf]
      %v473 = vld [vmem:[#allocation5 + $0x30] sm:$0xf]
      %v474 = vld [vmem:[#allocation5 + $0x34] sm:$0xf]
      %v475 = vld [vmem:[#allocation5 + $0x38] sm:$0xf]
      %v476 = vld [vmem:[#allocation5 + $0x3c] sm:$0xf]
      %v477 = vld [vmem:[%s8] sm:$0x1]
      %v479 = vlaneseq
      %v480 = vshrl.u32 %v479, 7
      %v481 = vsub.s32 0, %v480
      %v482 = vrot.slane %v477, %v481
      %v500 = vunpack.c.l.b16 %v461
      %v501 = vunpack.c.l.b16 %v462
      %v502 = vunpack.c.l.b16 %v463
      %v503 = vunpack.c.l.b16 %v464
      %v504 = vunpack.c.l.b16 %v465
      %v505 = vunpack.c.l.b16 %v466
      %v506 = vunpack.c.l.b16 %v467
      %v507 = vunpack.c.l.b16 %v468
      %v508 = vunpack.c.l.b16 %v469
      %v509 = vunpack.c.l.b16 %v470
      %v510 = vunpack.c.l.b16 %v471
      %v511 = vunpack.c.l.b16 %v472
      %v512 = vunpack.c.l.b16 %v473
      %v513 = vunpack.c.l.b16 %v474
      %v514 = vunpack.c.l.b16 %v475
      %v515 = vunpack.c.l.b16 %v476
      %v516 = vpack.c.b16 %v501, %v500
      %v517 = vpack.c.b16 %v503, %v502
      %v518 = vpack.c.b16 %v505, %v504
      %v519 = vpack.c.b16 %v507, %v506
      %v520 = vpack.c.b16 %v509, %v508
      %v521 = vpack.c.b16 %v511, %v510
      %v522 = vpack.c.b16 %v513, %v512
      %v523 = vpack.c.b16 %v515, %v514
      %532 = vmatprep.subr.bf16.mxu0 0
      %533 = vmatpush1.bf16.msra.mxu0 %v516
      %534 = vmatprep.subr.bf16.mxu0 0
      %535 = vmatpush1.bf16.msra.mxu0 %v517
      %536 = vmatprep.subr.bf16.mxu0 0
      %537 = vmatpush1.bf16.msra.mxu0 %v518
      %538 = vmatprep.subr.bf16.mxu0 0
      %539 = vmatpush1.bf16.msra.mxu0 %v519
      %540 = vmatprep.subr.bf16.mxu0 0
      %541 = vmatpush1.bf16.msra.mxu0 %v520
      %542 = vmatprep.subr.bf16.mxu0 0
      %543 = vmatpush1.bf16.msra.mxu0 %v521
      %544 = vmatprep.subr.bf16.mxu0 0
      %545 = vmatpush1.bf16.msra.mxu0 %v522
      %546 = vmatprep.subr.bf16.mxu0 0
      %547 = vmatpush1.bf16.msra.mxu0 %v523
      %548 = vmatprep.subr.bf16.mxu0 0
      %549 = vmatpush1.bf16.msra.mxu0 0
      %550 = vmatprep.subr.bf16.mxu0 0
      %551 = vmatpush1.bf16.msra.mxu0 0
      %552 = vmatprep.subr.bf16.mxu0 0
      %553 = vmatpush1.bf16.msra.mxu0 0
      %554 = vmatprep.subr.bf16.mxu0 0
      %555 = vmatpush1.bf16.msra.mxu0 0
      %556 = vmatprep.subr.bf16.mxu0 0
      %557 = vmatpush1.bf16.msra.mxu0 0
      %558 = vmatprep.subr.bf16.mxu0 0
      %559 = vmatpush1.bf16.msra.mxu0 0
      %560 = vmatprep.subr.bf16.mxu0 0
      %561 = vmatpush1.bf16.msra.mxu0 0
      %562 = vmatprep.subr.bf16.mxu0 0
      %563 = vmatpush1.bf16.msra.mxu0 0
      %564 = vmatprep.mubr.bf16.mxu0 0
      %565 = vmatmul.mubr.bf16.gmra.mrb[0].mxu0 %v460
      %v566 = vpop.f32.mrb[0].mxu0
      %v567 = vadd.f32 %v482, %v566
      %v568 = vpop.f32.mrb[0].mxu0
      %v569 = vpop.f32.mrb[0].mxu0
      %v570 = vpop.f32.mrb[0].mxu0
      %571 = vdwg.mxu0
      %v572 = vpack.c.bf16 %v290, %v290
      %v573 = vpack.c.bf16 %v567, %v567
      %v574 = vpack.c.bf16 %v380, %v380
      %v575 = vld [vmem:[#allocation7] sm:$0xf]
      %v576 = vld [vmem:[#allocation7 + $0x4] sm:$0xf]
      %v577 = vld [vmem:[#allocation7 + $0x8] sm:$0xf]
      %v578 = vld [vmem:[#allocation7 + $0xc] sm:$0xf]
      %v579 = vld [vmem:[#allocation7 + $0x10] sm:$0xf]
      %v580 = vld [vmem:[#allocation7 + $0x14] sm:$0xf]
      %v581 = vld [vmem:[#allocation7 + $0x18] sm:$0xf]
      %v582 = vld [vmem:[#allocation7 + $0x1c] sm:$0xf]
      %v583 = vld [vmem:[#allocation7 + $0x20] sm:$0xf]
      %v584 = vld [vmem:[#allocation7 + $0x24] sm:$0xf]
      %v585 = vld [vmem:[#allocation7 + $0x28] sm:$0xf]
      %v586 = vld [vmem:[#allocation7 + $0x2c] sm:$0xf]
      %v587 = vld [vmem:[#allocation7 + $0x30] sm:$0xf]
      %v588 = vld [vmem:[#allocation7 + $0x34] sm:$0xf]
      %v589 = vld [vmem:[#allocation7 + $0x38] sm:$0xf]
      %v590 = vld [vmem:[#allocation7 + $0x3c] sm:$0xf]
      %v591 = vld [vmem:[#allocation7 + $0x40] sm:$0xf]
      %v592 = vld [vmem:[#allocation7 + $0x44] sm:$0xf]
      %v593 = vld [vmem:[#allocation7 + $0x48] sm:$0xf]
      %v594 = vld [vmem:[#allocation7 + $0x4c] sm:$0xf]
      %v595 = vld [vmem:[#allocation7 + $0x50] sm:$0xf]
      %v596 = vld [vmem:[#allocation7 + $0x54] sm:$0xf]
      %v597 = vld [vmem:[#allocation7 + $0x58] sm:$0xf]
      %v598 = vld [vmem:[#allocation7 + $0x5c] sm:$0xf]
      %v599 = vld [vmem:[#allocation7 + $0x60] sm:$0xf]
      %v600 = vld [vmem:[#allocation7 + $0x64] sm:$0xf]
      %v601 = vld [vmem:[#allocation7 + $0x68] sm:$0xf]
      %v602 = vld [vmem:[#allocation7 + $0x6c] sm:$0xf]
      %v603 = vld [vmem:[#allocation7 + $0x70] sm:$0xf]
      %v604 = vld [vmem:[#allocation7 + $0x74] sm:$0xf]
      %v605 = vld [vmem:[#allocation7 + $0x78] sm:$0xf]
      %v606 = vld [vmem:[#allocation7 + $0x7c] sm:$0xf]
      %v607 = vld [vmem:[#allocation7 + $0x80] sm:$0xf]
      %v608 = vld [vmem:[#allocation7 + $0x84] sm:$0xf]
      %v609 = vld [vmem:[#allocation7 + $0x88] sm:$0xf]
      %v610 = vld [vmem:[#allocation7 + $0x8c] sm:$0xf]
      %v611 = vld [vmem:[#allocation7 + $0x90] sm:$0xf]
      %v612 = vld [vmem:[#allocation7 + $0x94] sm:$0xf]
      %v613 = vld [vmem:[#allocation7 + $0x98] sm:$0xf]
      %v614 = vld [vmem:[#allocation7 + $0x9c] sm:$0xf]
      %v615 = vld [vmem:[#allocation7 + $0xa0] sm:$0xf]
      %v616 = vld [vmem:[#allocation7 + $0xa4] sm:$0xf]
      %v617 = vld [vmem:[#allocation7 + $0xa8] sm:$0xf]
      %v618 = vld [vmem:[#allocation7 + $0xac] sm:$0xf]
      %v619 = vld [vmem:[#allocation7 + $0xb0] sm:$0xf]
      %v620 = vld [vmem:[#allocation7 + $0xb4] sm:$0xf]
      %v621 = vld [vmem:[#allocation7 + $0xb8] sm:$0xf]
      %v622 = vld [vmem:[#allocation7 + $0xbc] sm:$0xf]
      %v623 = vld [vmem:[%s10] sm:$0x1]
      %v625 = vlaneseq
      %v626 = vshrl.u32 %v625, 7
      %v627 = vsub.s32 0, %v626
      %v628 = vrot.slane %v623, %v627
      %v678 = vunpack.c.l.b16 %v575
      %v679 = vunpack.c.l.b16 %v576
      %v680 = vunpack.c.l.b16 %v577
      %v681 = vunpack.c.l.b16 %v578
      %v682 = vunpack.c.l.b16 %v579
      %v683 = vunpack.c.l.b16 %v580
      %v684 = vunpack.c.l.b16 %v581
      %v685 = vunpack.c.l.b16 %v582
      %v686 = vunpack.c.l.b16 %v583
      %v687 = vunpack.c.l.b16 %v584
      %v688 = vunpack.c.l.b16 %v585
      %v689 = vunpack.c.l.b16 %v586
      %v690 = vunpack.c.l.b16 %v587
      %v691 = vunpack.c.l.b16 %v588
      %v692 = vunpack.c.l.b16 %v589
      %v693 = vunpack.c.l.b16 %v590
      %v694 = vunpack.c.l.b16 %v591
      %v695 = vunpack.c.l.b16 %v592
      %v696 = vunpack.c.l.b16 %v593
      %v697 = vunpack.c.l.b16 %v594
      %v698 = vunpack.c.l.b16 %v595
      %v699 = vunpack.c.l.b16 %v596
      %v700 = vunpack.c.l.b16 %v597
      %v701 = vunpack.c.l.b16 %v598
      %v702 = vunpack.c.l.b16 %v599
      %v703 = vunpack.c.l.b16 %v600
      %v704 = vunpack.c.l.b16 %v601
      %v705 = vunpack.c.l.b16 %v602
      %v706 = vunpack.c.l.b16 %v603
      %v707 = vunpack.c.l.b16 %v604
      %v708 = vunpack.c.l.b16 %v605
      %v709 = vunpack.c.l.b16 %v606
      %v710 = vunpack.c.l.b16 %v607
      %v711 = vunpack.c.l.b16 %v608
      %v712 = vunpack.c.l.b16 %v609
      %v713 = vunpack.c.l.b16 %v610
      %v714 = vunpack.c.l.b16 %v611
      %v715 = vunpack.c.l.b16 %v612
      %v716 = vunpack.c.l.b16 %v613
      %v717 = vunpack.c.l.b16 %v614
      %v718 = vunpack.c.l.b16 %v615
      %v719 = vunpack.c.l.b16 %v616
      %v720 = vunpack.c.l.b16 %v617
      %v721 = vunpack.c.l.b16 %v618
      %v722 = vunpack.c.l.b16 %v619
      %v723 = vunpack.c.l.b16 %v620
      %v724 = vunpack.c.l.b16 %v621
      %v725 = vunpack.c.l.b16 %v622
      %v726 = vpack.c.b16 %v679, %v678
      %v727 = vpack.c.b16 %v681, %v680
      %v728 = vpack.c.b16 %v683, %v682
      %v729 = vpack.c.b16 %v685, %v684
      %v730 = vpack.c.b16 %v687, %v686
      %v731 = vpack.c.b16 %v689, %v688
      %v732 = vpack.c.b16 %v691, %v690
      %v733 = vpack.c.b16 %v693, %v692
      %v734 = vpack.c.b16 %v695, %v694
      %v735 = vpack.c.b16 %v697, %v696
      %v736 = vpack.c.b16 %v699, %v698
      %v737 = vpack.c.b16 %v701, %v700
      %v738 = vpack.c.b16 %v703, %v702
      %v739 = vpack.c.b16 %v705, %v704
      %v740 = vpack.c.b16 %v707, %v706
      %v741 = vpack.c.b16 %v709, %v708
      %v742 = vpack.c.b16 %v711, %v710
      %v743 = vpack.c.b16 %v713, %v712
      %v744 = vpack.c.b16 %v715, %v714
      %v745 = vpack.c.b16 %v717, %v716
      %v746 = vpack.c.b16 %v719, %v718
      %v747 = vpack.c.b16 %v721, %v720
      %v748 = vpack.c.b16 %v723, %v722
      %v749 = vpack.c.b16 %v725, %v724
      %774 = vmatprep.subr.bf16.mxu0 0
      %775 = vmatpush1.bf16.msra.mxu0 %v726
      %776 = vmatprep.subr.bf16.mxu0 0
      %777 = vmatpush1.bf16.msra.mxu0 %v727
      %778 = vmatprep.subr.bf16.mxu0 0
      %779 = vmatpush1.bf16.msra.mxu0 %v728
      %780 = vmatprep.subr.bf16.mxu0 0
      %781 = vmatpush1.bf16.msra.mxu0 %v729
      %782 = vmatprep.subr.bf16.mxu0 0
      %783 = vmatpush1.bf16.msra.mxu0 %v730
      %784 = vmatprep.subr.bf16.mxu0 0
      %785 = vmatpush1.bf16.msra.mxu0 %v731
      %786 = vmatprep.subr.bf16.mxu0 0
      %787 = vmatpush1.bf16.msra.mxu0 %v732
      %788 = vmatprep.subr.bf16.mxu0 0
      %789 = vmatpush1.bf16.msra.mxu0 %v733
      %790 = vmatprep.subr.bf16.mxu0 0
      %791 = vmatpush1.bf16.msra.mxu0 %v734
      %792 = vmatprep.subr.bf16.mxu0 0
      %793 = vmatpush1.bf16.msra.mxu0 %v735
      %794 = vmatprep.subr.bf16.mxu0 0
      %795 = vmatpush1.bf16.msra.mxu0 %v736
      %796 = vmatprep.subr.bf16.mxu0 0
      %797 = vmatpush1.bf16.msra.mxu0 %v737
      %798 = vmatprep.subr.bf16.mxu0 0
      %799 = vmatpush1.bf16.msra.mxu0 %v738
      %800 = vmatprep.subr.bf16.mxu0 0
      %801 = vmatpush1.bf16.msra.mxu0 %v739
      %802 = vmatprep.subr.bf16.mxu0 0
      %803 = vmatpush1.bf16.msra.mxu0 %v740
      %804 = vmatprep.subr.bf16.mxu0 0
      %805 = vmatpush1.bf16.msra.mxu0 %v741
      %806 = vmatprep.mubr.bf16.mxu0 %v573
      %807 = vmatmul.mubr.bf16.gmra.mrb[0].mxu0 %v572
      %v808 = vpop.f32.mrb[0].mxu0
      %v809 = vadd.f32 %v628, %v808
      %v810 = vpop.f32.mrb[0].mxu0
      %v811 = vpop.f32.mrb[0].mxu0
      %v812 = vpop.f32.mrb[0].mxu0
      %813 = vdwg.mxu0
      %814 = vmatprep.subr.bf16.mxu0 0
      %815 = vmatpush1.bf16.msra.mxu0 %v742
      %816 = vmatprep.subr.bf16.mxu0 0
      %817 = vmatpush1.bf16.msra.mxu0 %v743
      %818 = vmatprep.subr.bf16.mxu0 0
      %819 = vmatpush1.bf16.msra.mxu0 %v744
      %820 = vmatprep.subr.bf16.mxu0 0
      %821 = vmatpush1.bf16.msra.mxu0 %v745
      %822 = vmatprep.subr.bf16.mxu0 0
      %823 = vmatpush1.bf16.msra.mxu0 %v746
      %824 = vmatprep.subr.bf16.mxu0 0
      %825 = vmatpush1.bf16.msra.mxu0 %v747
      %826 = vmatprep.subr.bf16.mxu0 0
      %827 = vmatpush1.bf16.msra.mxu0 %v748
      %828 = vmatprep.subr.bf16.mxu0 0
      %829 = vmatpush1.bf16.msra.mxu0 %v749
      %830 = vmatprep.subr.bf16.mxu0 0
      %831 = vmatpush1.bf16.msra.mxu0 0
      %832 = vmatprep.subr.bf16.mxu0 0
      %833 = vmatpush1.bf16.msra.mxu0 0
      %834 = vmatprep.subr.bf16.mxu0 0
      %835 = vmatpush1.bf16.msra.mxu0 0
      %836 = vmatprep.subr.bf16.mxu0 0
      %837 = vmatpush1.bf16.msra.mxu0 0
      %838 = vmatprep.subr.bf16.mxu0 0
      %839 = vmatpush1.bf16.msra.mxu0 0
      %840 = vmatprep.subr.bf16.mxu0 0
      %841 = vmatpush1.bf16.msra.mxu0 0
      %842 = vmatprep.subr.bf16.mxu0 0
      %843 = vmatpush1.bf16.msra.mxu0 0
      %844 = vmatprep.subr.bf16.mxu0 0
      %845 = vmatpush1.bf16.msra.mxu0 0
      %846 = vmatprep.mubr.bf16.mxu0 0
      %847 = vmatmul.mubr.bf16.gmra.mrb[0].mxu0 %v574
      %v848 = vpop.f32.mrb[0].mxu0
      %v849 = vadd.f32 %v809, %v848
      %v850 = vpop.f32.mrb[0].mxu0
      %v851 = vpop.f32.mrb[0].mxu0
      %v852 = vpop.f32.mrb[0].mxu0
      %853 = vdwg.mxu0
      %v854 = vmax.f32 %v849, 0.0
      %v855 = vpack.c.bf16 %v854, %v854
      %v856 = vld [vmem:[#allocation8] sm:$0xf]
      %v857 = vld [vmem:[#allocation8 + $0x4] sm:$0xf]
      %v858 = vld [vmem:[#allocation8 + $0x8] sm:$0xf]
      %v859 = vld [vmem:[#allocation8 + $0xc] sm:$0xf]
      %v860 = vld [vmem:[#allocation8 + $0x10] sm:$0xf]
      %v861 = vld [vmem:[#allocation8 + $0x14] sm:$0xf]
      %v862 = vld [vmem:[#allocation8 + $0x18] sm:$0xf]
      %v863 = vld [vmem:[#allocation8 + $0x1c] sm:$0xf]
      %v864 = vld [vmem:[#allocation8 + $0x20] sm:$0xf]
      %v865 = vld [vmem:[#allocation8 + $0x24] sm:$0xf]
      %v866 = vld [vmem:[#allocation8 + $0x28] sm:$0xf]
      %v867 = vld [vmem:[#allocation8 + $0x2c] sm:$0xf]
      %v868 = vld [vmem:[#allocation8 + $0x30] sm:$0xf]
      %v869 = vld [vmem:[#allocation8 + $0x34] sm:$0xf]
      %v870 = vld [vmem:[#allocation8 + $0x38] sm:$0xf]
      %v871 = vld [vmem:[#allocation8 + $0x3c] sm:$0xf]
      %v872 = vld [vmem:[%s12] sm:$0x1]
      %v874 = vlaneseq
      %v875 = vshrl.u32 %v874, 7
      %v876 = vsub.s32 0, %v875
      %v877 = vrot.slane %v872, %v876
      %v895 = vunpack.c.l.b16 %v856
      %v896 = vunpack.c.l.b16 %v857
      %v897 = vunpack.c.l.b16 %v858
      %v898 = vunpack.c.l.b16 %v859
      %v899 = vunpack.c.l.b16 %v860
      %v900 = vunpack.c.l.b16 %v861
      %v901 = vunpack.c.l.b16 %v862
      %v902 = vunpack.c.l.b16 %v863
      %v903 = vunpack.c.l.b16 %v864
      %v904 = vunpack.c.l.b16 %v865
      %v905 = vunpack.c.l.b16 %v866
      %v906 = vunpack.c.l.b16 %v867
      %v907 = vunpack.c.l.b16 %v868
      %v908 = vunpack.c.l.b16 %v869
      %v909 = vunpack.c.l.b16 %v870
      %v910 = vunpack.c.l.b16 %v871
      %v911 = vpack.c.b16 %v896, %v895
      %v912 = vpack.c.b16 %v898, %v897
      %v913 = vpack.c.b16 %v900, %v899
      %v914 = vpack.c.b16 %v902, %v901
      %v915 = vpack.c.b16 %v904, %v903
      %v916 = vpack.c.b16 %v906, %v905
      %v917 = vpack.c.b16 %v908, %v907
      %v918 = vpack.c.b16 %v910, %v909
      %927 = vmatprep.subr.bf16.mxu0 0
      %928 = vmatpush1.bf16.msra.mxu0 %v911
      %929 = vmatprep.subr.bf16.mxu0 0
      %930 = vmatpush1.bf16.msra.mxu0 %v912
      %931 = vmatprep.subr.bf16.mxu0 0
      %932 = vmatpush1.bf16.msra.mxu0 %v913
      %933 = vmatprep.subr.bf16.mxu0 0
      %934 = vmatpush1.bf16.msra.mxu0 %v914
      %935 = vmatprep.subr.bf16.mxu0 0
      %936 = vmatpush1.bf16.msra.mxu0 %v915
      %937 = vmatprep.subr.bf16.mxu0 0
      %938 = vmatpush1.bf16.msra.mxu0 %v916
      %939 = vmatprep.subr.bf16.mxu0 0
      %940 = vmatpush1.bf16.msra.mxu0 %v917
      %941 = vmatprep.subr.bf16.mxu0 0
      %942 = vmatpush1.bf16.msra.mxu0 %v918
      %943 = vmatprep.subr.bf16.mxu0 0
      %944 = vmatpush1.bf16.msra.mxu0 0
      %945 = vmatprep.subr.bf16.mxu0 0
      %946 = vmatpush1.bf16.msra.mxu0 0
      %947 = vmatprep.subr.bf16.mxu0 0
      %948 = vmatpush1.bf16.msra.mxu0 0
      %949 = vmatprep.subr.bf16.mxu0 0
      %950 = vmatpush1.bf16.msra.mxu0 0
      %951 = vmatprep.subr.bf16.mxu0 0
      %952 = vmatpush1.bf16.msra.mxu0 0
      %953 = vmatprep.subr.bf16.mxu0 0
      %954 = vmatpush1.bf16.msra.mxu0 0
      %955 = vmatprep.subr.bf16.mxu0 0
      %956 = vmatpush1.bf16.msra.mxu0 0
      %957 = vmatprep.subr.bf16.mxu0 0
      %958 = vmatpush1.bf16.msra.mxu0 0
      %959 = vmatprep.mubr.bf16.mxu0 0
      %960 = vmatmul.mubr.bf16.gmra.mrb[0].mxu0 %v855
      %v961 = vpop.f32.mrb[0].mxu0
      %v962 = vadd.f32 %v877, %v961
      %v963 = vpop.f32.mrb[0].mxu0
      %v964 = vpop.f32.mrb[0].mxu0
      %v965 = vpop.f32.mrb[0].mxu0
      %966 = vdwg.mxu0
      %967 = vst [vmem:[#allocation2] sm:$0xff] %v962
      %968 = vst [vmem:[%s15] sm:$0xff] %v962
    $region81: #{predicate_visual_forward.1} parent=1 // pred_fallthru
      _
    %v969 = vld [vmem:[#allocation2] sm:$0xff]
    %v970 = vld [vmem:[#allocation10] sm:$0xff]
    %v971 = vld [vmem:[#allocation10 + $0x8] sm:$0xff]
    %v972 = vld [vmem:[#allocation10 + $0x10] sm:$0xff]
    %v973 = vld [vmem:[#allocation10 + $0x18] sm:$0xff]
    %v974 = vld [vmem:[#allocation10 + $0x20] sm:$0xff]
    %v975 = vld [vmem:[#allocation10 + $0x28] sm:$0xff]
    %v976 = vld [vmem:[#allocation10 + $0x30] sm:$0xff]
    %v977 = vld [vmem:[#allocation10 + $0x38] sm:$0xff]
    %v978 = vld [vmem:[#allocation10 + $0x40] sm:$0xff]
    %v979 = vld [vmem:[#allocation10 + $0x48] sm:$0xff]
    %v980 = vld [vmem:[#allocation10 + $0x50] sm:$0xff]
    %v981 = vld [vmem:[#allocation10 + $0x58] sm:$0xff]
    %v982 = vld [vmem:[#allocation10 + $0x60] sm:$0xff]
    %v983 = vld [vmem:[#allocation10 + $0x68] sm:$0xff]
    %v984 = vld [vmem:[#allocation10 + $0x70] sm:$0xff]
    %v985 = vld [vmem:[#allocation10 + $0x78] sm:$0xff]
    %v987 = vcombine.high %v969, %v969
    %v989 = vunpack.c.l.s4 1966171168
    %v990 = vunpack.c.0.s8 %v989
    %v991 = vlaneseq
    %v992 = vshrl.u32 %v991, 7
    %v993 = vsub.s32 %v990, %v992
    %v994 = vrot.slane %v969, %v993
    %v996 = vunpack.c.l.s4 1966171168
    %v997 = vunpack.c.0.s8 %v996
    %v998 = vlaneseq
    %v999 = vshrl.u32 %v998, 7
    %v1000 = vsub.s32 %v997, %v999
    %v1001 = vrot.slane %v987, %v1000
    %v1002 = vcombine.high %v994, %v994
    %v1003 = vcombine.high %v1001, %v1001
    %v1005 = vunpack.c.l.s4 1966171168
    %v1006 = vunpack.c.0.s8 %v1005
    %v1007 = vlaneseq
    %v1008 = vshrl.u32 %v1007, 7
    %v1009 = vsub.s32 %v1006, %v1008
    %v1010 = vrot.slane %v994, %v1009
    %v1012 = vunpack.c.l.s4 1966171168
    %v1013 = vunpack.c.0.s8 %v1012
    %v1014 = vlaneseq
    %v1015 = vshrl.u32 %v1014, 7
    %v1016 = vsub.s32 %v1013, %v1015
    %v1017 = vrot.slane %v1001, %v1016
    %v1019 = vunpack.c.l.s4 1966171168
    %v1020 = vunpack.c.0.s8 %v1019
    %v1021 = vlaneseq
    %v1022 = vshrl.u32 %v1021, 7
    %v1023 = vsub.s32 %v1020, %v1022
    %v1024 = vrot.slane %v1002, %v1023
    %v1026 = vunpack.c.l.s4 1966171168
    %v1027 = vunpack.c.0.s8 %v1026
    %v1028 = vlaneseq
    %v1029 = vshrl.u32 %v1028, 7
    %v1030 = vsub.s32 %v1027, %v1029
    %v1031 = vrot.slane %v1003, %v1030
    %v1032 = vcombine.high %v1010, %v1010
    %v1033 = vcombine.high %v1017, %v1017
    %v1034 = vcombine.high %v1024, %v1024
    %v1035 = vcombine.high %v1031, %v1031
    %v1036 = vlaneseq
    %v1037 = vshrl.u32 %v1036, 7
    %v1038 = vsub.s32 0, %v1037
    %v1039 = vrot.slane %v1010, %v1038
    %v1040 = vlaneseq
    %v1041 = vshrl.u32 %v1040, 7
    %v1042 = vsub.s32 0, %v1041
    %v1043 = vrot.slane %v1024, %v1042
    %v1044 = vlaneseq
    %v1045 = vshrl.u32 %v1044, 7
    %v1046 = vsub.s32 0, %v1045
    %v1047 = vrot.slane %v1032, %v1046
    %v1048 = vlaneseq
    %v1049 = vshrl.u32 %v1048, 7
    %v1050 = vsub.s32 0, %v1049
    %v1051 = vrot.slane %v1034, %v1050
    %v1052 = vlaneseq
    %v1053 = vshrl.u32 %v1052, 7
    %v1054 = vsub.s32 0, %v1053
    %v1055 = vrot.slane %v1017, %v1054
    %v1056 = vlaneseq
    %v1057 = vshrl.u32 %v1056, 7
    %v1058 = vsub.s32 0, %v1057
    %v1059 = vrot.slane %v1031, %v1058
    %v1060 = vlaneseq
    %v1061 = vshrl.u32 %v1060, 7
    %v1062 = vsub.s32 0, %v1061
    %v1063 = vrot.slane %v1033, %v1062
    %v1064 = vlaneseq
    %v1065 = vshrl.u32 %v1064, 7
    %v1066 = vsub.s32 0, %v1065
    %v1067 = vrot.slane %v1035, %v1066
    %v1076 = vsub.f32 %v970, %v1039
    %v1077 = vsub.f32 %v971, %v1039
    %v1078 = vsub.f32 %v972, %v1039
    %v1079 = vsub.f32 %v973, %v1039
    %v1080 = vsub.f32 %v974, %v1039
    %v1081 = vsub.f32 %v975, %v1039
    %v1082 = vsub.f32 %v976, %v1039
    %v1083 = vsub.f32 %v977, %v1039
    %v1084 = vsub.f32 %v978, %v1039
    %v1085 = vsub.f32 %v979, %v1039
    %v1086 = vsub.f32 %v980, %v1039
    %v1087 = vsub.f32 %v981, %v1039
    %v1088 = vsub.f32 %v982, %v1039
    %v1089 = vsub.f32 %v983, %v1039
    %v1090 = vsub.f32 %v984, %v1039
    %v1091 = vsub.f32 %v985, %v1039
    %v1092 = vsub.f32 %v970, %v1043
    %v1093 = vsub.f32 %v971, %v1043
    %v1094 = vsub.f32 %v972, %v1043
    %v1095 = vsub.f32 %v973, %v1043
    %v1096 = vsub.f32 %v974, %v1043
    %v1097 = vsub.f32 %v975, %v1043
    %v1098 = vsub.f32 %v976, %v1043
    %v1099 = vsub.f32 %v977, %v1043
    %v1100 = vsub.f32 %v978, %v1043
    %v1101 = vsub.f32 %v979, %v1043
    %v1102 = vsub.f32 %v980, %v1043
    %v1103 = vsub.f32 %v981, %v1043
    %v1104 = vsub.f32 %v982, %v1043
    %v1105 = vsub.f32 %v983, %v1043
    %v1106 = vsub.f32 %v984, %v1043
    %v1107 = vsub.f32 %v985, %v1043
    %v1108 = vsub.f32 %v970, %v1047
    %v1109 = vsub.f32 %v971, %v1047
    %v1110 = vsub.f32 %v972, %v1047
    %v1111 = vsub.f32 %v973, %v1047
    %v1112 = vsub.f32 %v974, %v1047
    %v1113 = vsub.f32 %v975, %v1047
    %v1114 = vsub.f32 %v976, %v1047
    %v1115 = vsub.f32 %v977, %v1047
    %v1116 = vsub.f32 %v978, %v1047
    %v1117 = vsub.f32 %v979, %v1047
    %v1118 = vsub.f32 %v980, %v1047
    %v1119 = vsub.f32 %v981, %v1047
    %v1120 = vsub.f32 %v982, %v1047
    %v1121 = vsub.f32 %v983, %v1047
    %v1122 = vsub.f32 %v984, %v1047
    %v1123 = vsub.f32 %v985, %v1047
    %v1124 = vsub.f32 %v970, %v1051
    %v1125 = vsub.f32 %v971, %v1051
    %v1126 = vsub.f32 %v972, %v1051
    %v1127 = vsub.f32 %v973, %v1051
    %v1128 = vsub.f32 %v974, %v1051
    %v1129 = vsub.f32 %v975, %v1051
    %v1130 = vsub.f32 %v976, %v1051
    %v1131 = vsub.f32 %v977, %v1051
    %v1132 = vsub.f32 %v978, %v1051
    %v1133 = vsub.f32 %v979, %v1051
    %v1134 = vsub.f32 %v980, %v1051
    %v1135 = vsub.f32 %v981, %v1051
    %v1136 = vsub.f32 %v982, %v1051
    %v1137 = vsub.f32 %v983, %v1051
    %v1138 = vsub.f32 %v984, %v1051
    %v1139 = vsub.f32 %v985, %v1051
    %v1140 = vsub.f32 %v970, %v1055
    %v1141 = vsub.f32 %v971, %v1055
    %v1142 = vsub.f32 %v972, %v1055
    %v1143 = vsub.f32 %v973, %v1055
    %v1144 = vsub.f32 %v974, %v1055
    %v1145 = vsub.f32 %v975, %v1055
    %v1146 = vsub.f32 %v976, %v1055
    %v1147 = vsub.f32 %v977, %v1055
    %v1148 = vsub.f32 %v978, %v1055
    %v1149 = vsub.f32 %v979, %v1055
    %v1150 = vsub.f32 %v980, %v1055
    %v1151 = vsub.f32 %v981, %v1055
    %v1152 = vsub.f32 %v982, %v1055
    %v1153 = vsub.f32 %v983, %v1055
    %v1154 = vsub.f32 %v984, %v1055
    %v1155 = vsub.f32 %v985, %v1055
    %v1156 = vsub.f32 %v970, %v1059
    %v1157 = vsub.f32 %v971, %v1059
    %v1158 = vsub.f32 %v972, %v1059
    %v1159 = vsub.f32 %v973, %v1059
    %v1160 = vsub.f32 %v974, %v1059
    %v1161 = vsub.f32 %v975, %v1059
    %v1162 = vsub.f32 %v976, %v1059
    %v1163 = vsub.f32 %v977, %v1059
    %v1164 = vsub.f32 %v978, %v1059
    %v1165 = vsub.f32 %v979, %v1059
    %v1166 = vsub.f32 %v980, %v1059
    %v1167 = vsub.f32 %v981, %v1059
    %v1168 = vsub.f32 %v982, %v1059
    %v1169 = vsub.f32 %v983, %v1059
    %v1170 = vsub.f32 %v984, %v1059
    %v1171 = vsub.f32 %v985, %v1059
    %v1172 = vsub.f32 %v970, %v1063
    %v1173 = vsub.f32 %v971, %v1063
    %v1174 = vsub.f32 %v972, %v1063
    %v1175 = vsub.f32 %v973, %v1063
    %v1176 = vsub.f32 %v974, %v1063
    %v1177 = vsub.f32 %v975, %v1063
    %v1178 = vsub.f32 %v976, %v1063
    %v1179 = vsub.f32 %v977, %v1063
    %v1180 = vsub.f32 %v978, %v1063
    %v1181 = vsub.f32 %v979, %v1063
    %v1182 = vsub.f32 %v980, %v1063
    %v1183 = vsub.f32 %v981, %v1063
    %v1184 = vsub.f32 %v982, %v1063
    %v1185 = vsub.f32 %v983, %v1063
    %v1186 = vsub.f32 %v984, %v1063
    %v1187 = vsub.f32 %v985, %v1063
    %v1188 = vsub.f32 %v970, %v1067
    %v1189 = vsub.f32 %v971, %v1067
    %v1190 = vsub.f32 %v972, %v1067
    %v1191 = vsub.f32 %v973, %v1067
    %v1192 = vsub.f32 %v974, %v1067
    %v1193 = vsub.f32 %v975, %v1067
    %v1194 = vsub.f32 %v976, %v1067
    %v1195 = vsub.f32 %v977, %v1067
    %v1196 = vsub.f32 %v978, %v1067
    %v1197 = vsub.f32 %v979, %v1067
    %v1198 = vsub.f32 %v980, %v1067
    %v1199 = vsub.f32 %v981, %v1067
    %v1200 = vsub.f32 %v982, %v1067
    %v1201 = vsub.f32 %v983, %v1067
    %v1202 = vsub.f32 %v984, %v1067
    %v1203 = vsub.f32 %v985, %v1067
    %v1204 = vmax.f32 %v1076, 0.0
    %v1205 = vmax.f32 %v1077, 0.0
    %v1206 = vmax.f32 %v1078, 0.0
    %v1207 = vmax.f32 %v1079, 0.0
    %v1208 = vmax.f32 %v1080, 0.0
    %v1209 = vmax.f32 %v1081, 0.0
    %v1210 = vmax.f32 %v1082, 0.0
    %v1211 = vmax.f32 %v1083, 0.0
    %v1212 = vmax.f32 %v1084, 0.0
    %v1213 = vmax.f32 %v1085, 0.0
    %v1214 = vmax.f32 %v1086, 0.0
    %v1215 = vmax.f32 %v1087, 0.0
    %v1216 = vmax.f32 %v1088, 0.0
    %v1217 = vmax.f32 %v1089, 0.0
    %v1218 = vmax.f32 %v1090, 0.0
    %v1219 = vmax.f32 %v1091, 0.0
    %v1220 = vmax.f32 %v1092, 0.0
    %v1221 = vmax.f32 %v1093, 0.0
    %v1222 = vmax.f32 %v1094, 0.0
    %v1223 = vmax.f32 %v1095, 0.0
    %v1224 = vmax.f32 %v1096, 0.0
    %v1225 = vmax.f32 %v1097, 0.0
    %v1226 = vmax.f32 %v1098, 0.0
    %v1227 = vmax.f32 %v1099, 0.0
    %v1228 = vmax.f32 %v1100, 0.0
    %v1229 = vmax.f32 %v1101, 0.0
    %v1230 = vmax.f32 %v1102, 0.0
    %v1231 = vmax.f32 %v1103, 0.0
    %v1232 = vmax.f32 %v1104, 0.0
    %v1233 = vmax.f32 %v1105, 0.0
    %v1234 = vmax.f32 %v1106, 0.0
    %v1235 = vmax.f32 %v1107, 0.0
    %v1236 = vmax.f32 %v1108, 0.0
    %v1237 = vmax.f32 %v1109, 0.0
    %v1238 = vmax.f32 %v1110, 0.0
    %v1239 = vmax.f32 %v1111, 0.0
    %v1240 = vmax.f32 %v1112, 0.0
    %v1241 = vmax.f32 %v1113, 0.0
    %v1242 = vmax.f32 %v1114, 0.0
    %v1243 = vmax.f32 %v1115, 0.0
    %v1244 = vmax.f32 %v1116, 0.0
    %v1245 = vmax.f32 %v1117, 0.0
    %v1246 = vmax.f32 %v1118, 0.0
    %v1247 = vmax.f32 %v1119, 0.0
    %v1248 = vmax.f32 %v1120, 0.0
    %v1249 = vmax.f32 %v1121, 0.0
    %v1250 = vmax.f32 %v1122, 0.0
    %v1251 = vmax.f32 %v1123, 0.0
    %v1252 = vmax.f32 %v1124, 0.0
    %v1253 = vmax.f32 %v1125, 0.0
    %v1254 = vmax.f32 %v1126, 0.0
    %v1255 = vmax.f32 %v1127, 0.0
    %v1256 = vmax.f32 %v1128, 0.0
    %v1257 = vmax.f32 %v1129, 0.0
    %v1258 = vmax.f32 %v1130, 0.0
    %v1259 = vmax.f32 %v1131, 0.0
    %v1260 = vmax.f32 %v1132, 0.0
    %v1261 = vmax.f32 %v1133, 0.0
    %v1262 = vmax.f32 %v1134, 0.0
    %v1263 = vmax.f32 %v1135, 0.0
    %v1264 = vmax.f32 %v1136, 0.0
    %v1265 = vmax.f32 %v1137, 0.0
    %v1266 = vmax.f32 %v1138, 0.0
    %v1267 = vmax.f32 %v1139, 0.0
    %v1268 = vmax.f32 %v1140, 0.0
    %v1269 = vmax.f32 %v1141, 0.0
    %v1270 = vmax.f32 %v1142, 0.0
    %v1271 = vmax.f32 %v1143, 0.0
    %v1272 = vmax.f32 %v1144, 0.0
    %v1273 = vmax.f32 %v1145, 0.0
    %v1274 = vmax.f32 %v1146, 0.0
    %v1275 = vmax.f32 %v1147, 0.0
    %v1276 = vmax.f32 %v1148, 0.0
    %v1277 = vmax.f32 %v1149, 0.0
    %v1278 = vmax.f32 %v1150, 0.0
    %v1279 = vmax.f32 %v1151, 0.0
    %v1280 = vmax.f32 %v1152, 0.0
    %v1281 = vmax.f32 %v1153, 0.0
    %v1282 = vmax.f32 %v1154, 0.0
    %v1283 = vmax.f32 %v1155, 0.0
    %v1284 = vmax.f32 %v1156, 0.0
    %v1285 = vmax.f32 %v1157, 0.0
    %v1286 = vmax.f32 %v1158, 0.0
    %v1287 = vmax.f32 %v1159, 0.0
    %v1288 = vmax.f32 %v1160, 0.0
    %v1289 = vmax.f32 %v1161, 0.0
    %v1290 = vmax.f32 %v1162, 0.0
    %v1291 = vmax.f32 %v1163, 0.0
    %v1292 = vmax.f32 %v1164, 0.0
    %v1293 = vmax.f32 %v1165, 0.0
    %v1294 = vmax.f32 %v1166, 0.0
    %v1295 = vmax.f32 %v1167, 0.0
    %v1296 = vmax.f32 %v1168, 0.0
    %v1297 = vmax.f32 %v1169, 0.0
    %v1298 = vmax.f32 %v1170, 0.0
    %v1299 = vmax.f32 %v1171, 0.0
    %v1300 = vmax.f32 %v1172, 0.0
    %v1301 = vmax.f32 %v1173, 0.0
    %v1302 = vmax.f32 %v1174, 0.0
    %v1303 = vmax.f32 %v1175, 0.0
    %v1304 = vmax.f32 %v1176, 0.0
    %v1305 = vmax.f32 %v1177, 0.0
    %v1306 = vmax.f32 %v1178, 0.0
    %v1307 = vmax.f32 %v1179, 0.0
    %v1308 = vmax.f32 %v1180, 0.0
    %v1309 = vmax.f32 %v1181, 0.0
    %v1310 = vmax.f32 %v1182, 0.0
    %v1311 = vmax.f32 %v1183, 0.0
    %v1312 = vmax.f32 %v1184, 0.0
    %v1313 = vmax.f32 %v1185, 0.0
    %v1314 = vmax.f32 %v1186, 0.0
    %v1315 = vmax.f32 %v1187, 0.0
    %v1316 = vmax.f32 %v1188, 0.0
    %v1317 = vmax.f32 %v1189, 0.0
    %v1318 = vmax.f32 %v1190, 0.0
    %v1319 = vmax.f32 %v1191, 0.0
    %v1320 = vmax.f32 %v1192, 0.0
    %v1321 = vmax.f32 %v1193, 0.0
    %v1322 = vmax.f32 %v1194, 0.0
    %v1323 = vmax.f32 %v1195, 0.0
    %v1324 = vmax.f32 %v1196, 0.0
    %v1325 = vmax.f32 %v1197, 0.0
    %v1326 = vmax.f32 %v1198, 0.0
    %v1327 = vmax.f32 %v1199, 0.0
    %v1328 = vmax.f32 %v1200, 0.0
    %v1329 = vmax.f32 %v1201, 0.0
    %v1330 = vmax.f32 %v1202, 0.0
    %v1331 = vmax.f32 %v1203, 0.0
    %v1332 = vmul.f32 %v1204, %v1204
    %v1333 = vmul.f32 %v1205, %v1205
    %v1334 = vmul.f32 %v1206, %v1206
    %v1335 = vmul.f32 %v1207, %v1207
    %v1336 = vmul.f32 %v1208, %v1208
    %v1337 = vmul.f32 %v1209, %v1209
    %v1338 = vmul.f32 %v1210, %v1210
    %v1339 = vmul.f32 %v1211, %v1211
    %v1340 = vmul.f32 %v1212, %v1212
    %v1341 = vmul.f32 %v1213, %v1213
    %v1342 = vmul.f32 %v1214, %v1214
    %v1343 = vmul.f32 %v1215, %v1215
    %v1344 = vmul.f32 %v1216, %v1216
    %v1345 = vmul.f32 %v1217, %v1217
    %v1346 = vmul.f32 %v1218, %v1218
    %v1347 = vmul.f32 %v1219, %v1219
    %v1348 = vmul.f32 %v1220, %v1220
    %v1349 = vmul.f32 %v1221, %v1221
    %v1350 = vmul.f32 %v1222, %v1222
    %v1351 = vmul.f32 %v1223, %v1223
    %v1352 = vmul.f32 %v1224, %v1224
    %v1353 = vmul.f32 %v1225, %v1225
    %v1354 = vmul.f32 %v1226, %v1226
    %v1355 = vmul.f32 %v1227, %v1227
    %v1356 = vmul.f32 %v1228, %v1228
    %v1357 = vmul.f32 %v1229, %v1229
    %v1358 = vmul.f32 %v1230, %v1230
    %v1359 = vmul.f32 %v1231, %v1231
    %v1360 = vmul.f32 %v1232, %v1232
    %v1361 = vmul.f32 %v1233, %v1233
    %v1362 = vmul.f32 %v1234, %v1234
    %v1363 = vmul.f32 %v1235, %v1235
    %v1364 = vmul.f32 %v1236, %v1236
    %v1365 = vmul.f32 %v1237, %v1237
    %v1366 = vmul.f32 %v1238, %v1238
    %v1367 = vmul.f32 %v1239, %v1239
    %v1368 = vmul.f32 %v1240, %v1240
    %v1369 = vmul.f32 %v1241, %v1241
    %v1370 = vmul.f32 %v1242, %v1242
    %v1371 = vmul.f32 %v1243, %v1243
    %v1372 = vmul.f32 %v1244, %v1244
    %v1373 = vmul.f32 %v1245, %v1245
    %v1374 = vmul.f32 %v1246, %v1246
    %v1375 = vmul.f32 %v1247, %v1247
    %v1376 = vmul.f32 %v1248, %v1248
    %v1377 = vmul.f32 %v1249, %v1249
    %v1378 = vmul.f32 %v1250, %v1250
    %v1379 = vmul.f32 %v1251, %v1251
    %v1380 = vmul.f32 %v1252, %v1252
    %v1381 = vmul.f32 %v1253, %v1253
    %v1382 = vmul.f32 %v1254, %v1254
    %v1383 = vmul.f32 %v1255, %v1255
    %v1384 = vmul.f32 %v1256, %v1256
    %v1385 = vmul.f32 %v1257, %v1257
    %v1386 = vmul.f32 %v1258, %v1258
    %v1387 = vmul.f32 %v1259, %v1259
    %v1388 = vmul.f32 %v1260, %v1260
    %v1389 = vmul.f32 %v1261, %v1261
    %v1390 = vmul.f32 %v1262, %v1262
    %v1391 = vmul.f32 %v1263, %v1263
    %v1392 = vmul.f32 %v1264, %v1264
    %v1393 = vmul.f32 %v1265, %v1265
    %v1394 = vmul.f32 %v1266, %v1266
    %v1395 = vmul.f32 %v1267, %v1267
    %v1396 = vmul.f32 %v1268, %v1268
    %v1397 = vmul.f32 %v1269, %v1269
    %v1398 = vmul.f32 %v1270, %v1270
    %v1399 = vmul.f32 %v1271, %v1271
    %v1400 = vmul.f32 %v1272, %v1272
    %v1401 = vmul.f32 %v1273, %v1273
    %v1402 = vmul.f32 %v1274, %v1274
    %v1403 = vmul.f32 %v1275, %v1275
    %v1404 = vmul.f32 %v1276, %v1276
    %v1405 = vmul.f32 %v1277, %v1277
    %v1406 = vmul.f32 %v1278, %v1278
    %v1407 = vmul.f32 %v1279, %v1279
    %v1408 = vmul.f32 %v1280, %v1280
    %v1409 = vmul.f32 %v1281, %v1281
    %v1410 = vmul.f32 %v1282, %v1282
    %v1411 = vmul.f32 %v1283, %v1283
    %v1412 = vmul.f32 %v1284, %v1284
    %v1413 = vmul.f32 %v1285, %v1285
    %v1414 = vmul.f32 %v1286, %v1286
    %v1415 = vmul.f32 %v1287, %v1287
    %v1416 = vmul.f32 %v1288, %v1288
    %v1417 = vmul.f32 %v1289, %v1289
    %v1418 = vmul.f32 %v1290, %v1290
    %v1419 = vmul.f32 %v1291, %v1291
    %v1420 = vmul.f32 %v1292, %v1292
    %v1421 = vmul.f32 %v1293, %v1293
    %v1422 = vmul.f32 %v1294, %v1294
    %v1423 = vmul.f32 %v1295, %v1295
    %v1424 = vmul.f32 %v1296, %v1296
    %v1425 = vmul.f32 %v1297, %v1297
    %v1426 = vmul.f32 %v1298, %v1298
    %v1427 = vmul.f32 %v1299, %v1299
    %v1428 = vmul.f32 %v1300, %v1300
    %v1429 = vmul.f32 %v1301, %v1301
    %v1430 = vmul.f32 %v1302, %v1302
    %v1431 = vmul.f32 %v1303, %v1303
    %v1432 = vmul.f32 %v1304, %v1304
    %v1433 = vmul.f32 %v1305, %v1305
    %v1434 = vmul.f32 %v1306, %v1306
    %v1435 = vmul.f32 %v1307, %v1307
    %v1436 = vmul.f32 %v1308, %v1308
    %v1437 = vmul.f32 %v1309, %v1309
    %v1438 = vmul.f32 %v1310, %v1310
    %v1439 = vmul.f32 %v1311, %v1311
    %v1440 = vmul.f32 %v1312, %v1312
    %v1441 = vmul.f32 %v1313, %v1313
    %v1442 = vmul.f32 %v1314, %v1314
    %v1443 = vmul.f32 %v1315, %v1315
    %v1444 = vmul.f32 %v1316, %v1316
    %v1445 = vmul.f32 %v1317, %v1317
    %v1446 = vmul.f32 %v1318, %v1318
    %v1447 = vmul.f32 %v1319, %v1319
    %v1448 = vmul.f32 %v1320, %v1320
    %v1449 = vmul.f32 %v1321, %v1321
    %v1450 = vmul.f32 %v1322, %v1322
    %v1451 = vmul.f32 %v1323, %v1323
    %v1452 = vmul.f32 %v1324, %v1324
    %v1453 = vmul.f32 %v1325, %v1325
    %v1454 = vmul.f32 %v1326, %v1326
    %v1455 = vmul.f32 %v1327, %v1327
    %v1456 = vmul.f32 %v1328, %v1328
    %v1457 = vmul.f32 %v1329, %v1329
    %v1458 = vmul.f32 %v1330, %v1330
    %v1459 = vmul.f32 %v1331, %v1331
    %1460 = vadd.xlane.f32.xlu0 %v1332
    %v1461 = vpop.xlane.xlu0 %1460
    %1462 = vadd.xlane.f32.xlu0 %v1333
    %v1463 = vpop.xlane.xlu0 %1462
    %1464 = vadd.xlane.f32.xlu0 %v1334
    %v1465 = vpop.xlane.xlu0 %1464
    %1466 = vadd.xlane.f32.xlu0 %v1335
    %v1467 = vpop.xlane.xlu0 %1466
    %1468 = vadd.xlane.f32.xlu0 %v1336
    %v1469 = vpop.xlane.xlu0 %1468
    %1470 = vadd.xlane.f32.xlu0 %v1337
    %v1471 = vpop.xlane.xlu0 %1470
    %1472 = vadd.xlane.f32.xlu0 %v1338
    %v1473 = vpop.xlane.xlu0 %1472
    %1474 = vadd.xlane.f32.xlu0 %v1339
    %v1475 = vpop.xlane.xlu0 %1474
    %1476 = vadd.xlane.f32.xlu0 %v1340
    %v1477 = vpop.xlane.xlu0 %1476
    %1478 = vadd.xlane.f32.xlu0 %v1341
    %v1479 = vpop.xlane.xlu0 %1478
    %1480 = vadd.xlane.f32.xlu0 %v1342
    %v1481 = vpop.xlane.xlu0 %1480
    %1482 = vadd.xlane.f32.xlu0 %v1343
    %v1483 = vpop.xlane.xlu0 %1482
    %1484 = vadd.xlane.f32.xlu0 %v1344
    %v1485 = vpop.xlane.xlu0 %1484
    %1486 = vadd.xlane.f32.xlu0 %v1345
    %v1487 = vpop.xlane.xlu0 %1486
    %1488 = vadd.xlane.f32.xlu0 %v1346
    %v1489 = vpop.xlane.xlu0 %1488
    %1490 = vadd.xlane.f32.xlu0 %v1347
    %v1491 = vpop.xlane.xlu0 %1490
    %1492 = vadd.xlane.f32.xlu0 %v1348
    %v1493 = vpop.xlane.xlu0 %1492
    %1494 = vadd.xlane.f32.xlu0 %v1349
    %v1495 = vpop.xlane.xlu0 %1494
    %1496 = vadd.xlane.f32.xlu0 %v1350
    %v1497 = vpop.xlane.xlu0 %1496
    %1498 = vadd.xlane.f32.xlu0 %v1351
    %v1499 = vpop.xlane.xlu0 %1498
    %1500 = vadd.xlane.f32.xlu0 %v1352
    %v1501 = vpop.xlane.xlu0 %1500
    %1502 = vadd.xlane.f32.xlu0 %v1353
    %v1503 = vpop.xlane.xlu0 %1502
    %1504 = vadd.xlane.f32.xlu0 %v1354
    %v1505 = vpop.xlane.xlu0 %1504
    %1506 = vadd.xlane.f32.xlu0 %v1355
    %v1507 = vpop.xlane.xlu0 %1506
    %1508 = vadd.xlane.f32.xlu0 %v1356
    %v1509 = vpop.xlane.xlu0 %1508
    %1510 = vadd.xlane.f32.xlu0 %v1357
    %v1511 = vpop.xlane.xlu0 %1510
    %1512 = vadd.xlane.f32.xlu0 %v1358
    %v1513 = vpop.xlane.xlu0 %1512
    %1514 = vadd.xlane.f32.xlu0 %v1359
    %v1515 = vpop.xlane.xlu0 %1514
    %1516 = vadd.xlane.f32.xlu0 %v1360
    %v1517 = vpop.xlane.xlu0 %1516
    %1518 = vadd.xlane.f32.xlu0 %v1361
    %v1519 = vpop.xlane.xlu0 %1518
    %1520 = vadd.xlane.f32.xlu0 %v1362
    %v1521 = vpop.xlane.xlu0 %1520
    %1522 = vadd.xlane.f32.xlu0 %v1363
    %v1523 = vpop.xlane.xlu0 %1522
    %1524 = vadd.xlane.f32.xlu0 %v1364
    %v1525 = vpop.xlane.xlu0 %1524
    %1526 = vadd.xlane.f32.xlu0 %v1365
    %v1527 = vpop.xlane.xlu0 %1526
    %1528 = vadd.xlane.f32.xlu0 %v1366
    %v1529 = vpop.xlane.xlu0 %1528
    %1530 = vadd.xlane.f32.xlu0 %v1367
    %v1531 = vpop.xlane.xlu0 %1530
    %1532 = vadd.xlane.f32.xlu0 %v1368
    %v1533 = vpop.xlane.xlu0 %1532
    %1534 = vadd.xlane.f32.xlu0 %v1369
    %v1535 = vpop.xlane.xlu0 %1534
    %1536 = vadd.xlane.f32.xlu0 %v1370
    %v1537 = vpop.xlane.xlu0 %1536
    %1538 = vadd.xlane.f32.xlu0 %v1371
    %v1539 = vpop.xlane.xlu0 %1538
    %1540 = vadd.xlane.f32.xlu0 %v1372
    %v1541 = vpop.xlane.xlu0 %1540
    %1542 = vadd.xlane.f32.xlu0 %v1373
    %v1543 = vpop.xlane.xlu0 %1542
    %1544 = vadd.xlane.f32.xlu0 %v1374
    %v1545 = vpop.xlane.xlu0 %1544
    %1546 = vadd.xlane.f32.xlu0 %v1375
    %v1547 = vpop.xlane.xlu0 %1546
    %1548 = vadd.xlane.f32.xlu0 %v1376
    %v1549 = vpop.xlane.xlu0 %1548
    %1550 = vadd.xlane.f32.xlu0 %v1377
    %v1551 = vpop.xlane.xlu0 %1550
    %1552 = vadd.xlane.f32.xlu0 %v1378
    %v1553 = vpop.xlane.xlu0 %1552
    %1554 = vadd.xlane.f32.xlu0 %v1379
    %v1555 = vpop.xlane.xlu0 %1554
    %1556 = vadd.xlane.f32.xlu0 %v1380
    %v1557 = vpop.xlane.xlu0 %1556
    %1558 = vadd.xlane.f32.xlu0 %v1381
    %v1559 = vpop.xlane.xlu0 %1558
    %1560 = vadd.xlane.f32.xlu0 %v1382
    %v1561 = vpop.xlane.xlu0 %1560
    %1562 = vadd.xlane.f32.xlu0 %v1383
    %v1563 = vpop.xlane.xlu0 %1562
    %1564 = vadd.xlane.f32.xlu0 %v1384
    %v1565 = vpop.xlane.xlu0 %1564
    %1566 = vadd.xlane.f32.xlu0 %v1385
    %v1567 = vpop.xlane.xlu0 %1566
    %1568 = vadd.xlane.f32.xlu0 %v1386
    %v1569 = vpop.xlane.xlu0 %1568
    %1570 = vadd.xlane.f32.xlu0 %v1387
    %v1571 = vpop.xlane.xlu0 %1570
    %1572 = vadd.xlane.f32.xlu0 %v1388
    %v1573 = vpop.xlane.xlu0 %1572
    %1574 = vadd.xlane.f32.xlu0 %v1389
    %v1575 = vpop.xlane.xlu0 %1574
    %1576 = vadd.xlane.f32.xlu0 %v1390
    %v1577 = vpop.xlane.xlu0 %1576
    %1578 = vadd.xlane.f32.xlu0 %v1391
    %v1579 = vpop.xlane.xlu0 %1578
    %1580 = vadd.xlane.f32.xlu0 %v1392
    %v1581 = vpop.xlane.xlu0 %1580
    %1582 = vadd.xlane.f32.xlu0 %v1393
    %v1583 = vpop.xlane.xlu0 %1582
    %1584 = vadd.xlane.f32.xlu0 %v1394
    %v1585 = vpop.xlane.xlu0 %1584
    %1586 = vadd.xlane.f32.xlu0 %v1395
    %v1587 = vpop.xlane.xlu0 %1586
    %1588 = vadd.xlane.f32.xlu0 %v1396
    %v1589 = vpop.xlane.xlu0 %1588
    %1590 = vadd.xlane.f32.xlu0 %v1397
    %v1591 = vpop.xlane.xlu0 %1590
    %1592 = vadd.xlane.f32.xlu0 %v1398
    %v1593 = vpop.xlane.xlu0 %1592
    %1594 = vadd.xlane.f32.xlu0 %v1399
    %v1595 = vpop.xlane.xlu0 %1594
    %1596 = vadd.xlane.f32.xlu0 %v1400
    %v1597 = vpop.xlane.xlu0 %1596
    %1598 = vadd.xlane.f32.xlu0 %v1401
    %v1599 = vpop.xlane.xlu0 %1598
    %1600 = vadd.xlane.f32.xlu0 %v1402
    %v1601 = vpop.xlane.xlu0 %1600
    %1602 = vadd.xlane.f32.xlu0 %v1403
    %v1603 = vpop.xlane.xlu0 %1602
    %1604 = vadd.xlane.f32.xlu0 %v1404
    %v1605 = vpop.xlane.xlu0 %1604
    %1606 = vadd.xlane.f32.xlu0 %v1405
    %v1607 = vpop.xlane.xlu0 %1606
    %1608 = vadd.xlane.f32.xlu0 %v1406
    %v1609 = vpop.xlane.xlu0 %1608
    %1610 = vadd.xlane.f32.xlu0 %v1407
    %v1611 = vpop.xlane.xlu0 %1610
    %1612 = vadd.xlane.f32.xlu0 %v1408
    %v1613 = vpop.xlane.xlu0 %1612
    %1614 = vadd.xlane.f32.xlu0 %v1409
    %v1615 = vpop.xlane.xlu0 %1614
    %1616 = vadd.xlane.f32.xlu0 %v1410
    %v1617 = vpop.xlane.xlu0 %1616
    %1618 = vadd.xlane.f32.xlu0 %v1411
    %v1619 = vpop.xlane.xlu0 %1618
    %1620 = vadd.xlane.f32.xlu0 %v1412
    %v1621 = vpop.xlane.xlu0 %1620
    %1622 = vadd.xlane.f32.xlu0 %v1413
    %v1623 = vpop.xlane.xlu0 %1622
    %1624 = vadd.xlane.f32.xlu0 %v1414
    %v1625 = vpop.xlane.xlu0 %1624
    %1626 = vadd.xlane.f32.xlu0 %v1415
    %v1627 = vpop.xlane.xlu0 %1626
    %1628 = vadd.xlane.f32.xlu0 %v1416
    %v1629 = vpop.xlane.xlu0 %1628
    %1630 = vadd.xlane.f32.xlu0 %v1417
    %v1631 = vpop.xlane.xlu0 %1630
    %1632 = vadd.xlane.f32.xlu0 %v1418
    %v1633 = vpop.xlane.xlu0 %1632
    %1634 = vadd.xlane.f32.xlu0 %v1419
    %v1635 = vpop.xlane.xlu0 %1634
    %1636 = vadd.xlane.f32.xlu0 %v1420
    %v1637 = vpop.xlane.xlu0 %1636
    %1638 = vadd.xlane.f32.xlu0 %v1421
    %v1639 = vpop.xlane.xlu0 %1638
    %1640 = vadd.xlane.f32.xlu0 %v1422
    %v1641 = vpop.xlane.xlu0 %1640
    %1642 = vadd.xlane.f32.xlu0 %v1423
    %v1643 = vpop.xlane.xlu0 %1642
    %1644 = vadd.xlane.f32.xlu0 %v1424
    %v1645 = vpop.xlane.xlu0 %1644
    %1646 = vadd.xlane.f32.xlu0 %v1425
    %v1647 = vpop.xlane.xlu0 %1646
    %1648 = vadd.xlane.f32.xlu0 %v1426
    %v1649 = vpop.xlane.xlu0 %1648
    %1650 = vadd.xlane.f32.xlu0 %v1427
    %v1651 = vpop.xlane.xlu0 %1650
    %1652 = vadd.xlane.f32.xlu0 %v1428
    %v1653 = vpop.xlane.xlu0 %1652
    %1654 = vadd.xlane.f32.xlu0 %v1429
    %v1655 = vpop.xlane.xlu0 %1654
    %1656 = vadd.xlane.f32.xlu0 %v1430
    %v1657 = vpop.xlane.xlu0 %1656
    %1658 = vadd.xlane.f32.xlu0 %v1431
    %v1659 = vpop.xlane.xlu0 %1658
    %1660 = vadd.xlane.f32.xlu0 %v1432
    %v1661 = vpop.xlane.xlu0 %1660
    %1662 = vadd.xlane.f32.xlu0 %v1433
    %v1663 = vpop.xlane.xlu0 %1662
    %1664 = vadd.xlane.f32.xlu0 %v1434
    %v1665 = vpop.xlane.xlu0 %1664
    %1666 = vadd.xlane.f32.xlu0 %v1435
    %v1667 = vpop.xlane.xlu0 %1666
    %1668 = vadd.xlane.f32.xlu0 %v1436
    %v1669 = vpop.xlane.xlu0 %1668
    %1670 = vadd.xlane.f32.xlu0 %v1437
    %v1671 = vpop.xlane.xlu0 %1670
    %1672 = vadd.xlane.f32.xlu0 %v1438
    %v1673 = vpop.xlane.xlu0 %1672
    %1674 = vadd.xlane.f32.xlu0 %v1439
    %v1675 = vpop.xlane.xlu0 %1674
    %1676 = vadd.xlane.f32.xlu0 %v1440
    %v1677 = vpop.xlane.xlu0 %1676
    %1678 = vadd.xlane.f32.xlu0 %v1441
    %v1679 = vpop.xlane.xlu0 %1678
    %1680 = vadd.xlane.f32.xlu0 %v1442
    %v1681 = vpop.xlane.xlu0 %1680
    %1682 = vadd.xlane.f32.xlu0 %v1443
    %v1683 = vpop.xlane.xlu0 %1682
    %1684 = vadd.xlane.f32.xlu0 %v1444
    %v1685 = vpop.xlane.xlu0 %1684
    %1686 = vadd.xlane.f32.xlu0 %v1445
    %v1687 = vpop.xlane.xlu0 %1686
    %1688 = vadd.xlane.f32.xlu0 %v1446
    %v1689 = vpop.xlane.xlu0 %1688
    %1690 = vadd.xlane.f32.xlu0 %v1447
    %v1691 = vpop.xlane.xlu0 %1690
    %1692 = vadd.xlane.f32.xlu0 %v1448
    %v1693 = vpop.xlane.xlu0 %1692
    %1694 = vadd.xlane.f32.xlu0 %v1449
    %v1695 = vpop.xlane.xlu0 %1694
    %1696 = vadd.xlane.f32.xlu0 %v1450
    %v1697 = vpop.xlane.xlu0 %1696
    %1698 = vadd.xlane.f32.xlu0 %v1451
    %v1699 = vpop.xlane.xlu0 %1698
    %1700 = vadd.xlane.f32.xlu0 %v1452
    %v1701 = vpop.xlane.xlu0 %1700
    %1702 = vadd.xlane.f32.xlu0 %v1453
    %v1703 = vpop.xlane.xlu0 %1702
    %1704 = vadd.xlane.f32.xlu0 %v1454
    %v1705 = vpop.xlane.xlu0 %1704
    %1706 = vadd.xlane.f32.xlu0 %v1455
    %v1707 = vpop.xlane.xlu0 %1706
    %1708 = vadd.xlane.f32.xlu0 %v1456
    %v1709 = vpop.xlane.xlu0 %1708
    %1710 = vadd.xlane.f32.xlu0 %v1457
    %v1711 = vpop.xlane.xlu0 %1710
    %1712 = vadd.xlane.f32.xlu0 %v1458
    %v1713 = vpop.xlane.xlu0 %1712
    %1714 = vadd.xlane.f32.xlu0 %v1459
    %v1715 = vpop.xlane.xlu0 %1714
    %v1716 = vsub.f32 0.0, %v1461
    %v1717 = vsub.f32 0.0, %v1463
    %v1718 = vsub.f32 0.0, %v1465
    %v1719 = vsub.f32 0.0, %v1467
    %v1720 = vsub.f32 0.0, %v1469
    %v1721 = vsub.f32 0.0, %v1471
    %v1722 = vsub.f32 0.0, %v1473
    %v1723 = vsub.f32 0.0, %v1475
    %v1724 = vsub.f32 0.0, %v1477
    %v1725 = vsub.f32 0.0, %v1479
    %v1726 = vsub.f32 0.0, %v1481
    %v1727 = vsub.f32 0.0, %v1483
    %v1728 = vsub.f32 0.0, %v1485
    %v1729 = vsub.f32 0.0, %v1487
    %v1730 = vsub.f32 0.0, %v1489
    %v1731 = vsub.f32 0.0, %v1491
    %v1732 = vsub.f32 0.0, %v1493
    %v1733 = vsub.f32 0.0, %v1495
    %v1734 = vsub.f32 0.0, %v1497
    %v1735 = vsub.f32 0.0, %v1499
    %v1736 = vsub.f32 0.0, %v1501
    %v1737 = vsub.f32 0.0, %v1503
    %v1738 = vsub.f32 0.0, %v1505
    %v1739 = vsub.f32 0.0, %v1507
    %v1740 = vsub.f32 0.0, %v1509
    %v1741 = vsub.f32 0.0, %v1511
    %v1742 = vsub.f32 0.0, %v1513
    %v1743 = vsub.f32 0.0, %v1515
    %v1744 = vsub.f32 0.0, %v1517
    %v1745 = vsub.f32 0.0, %v1519
    %v1746 = vsub.f32 0.0, %v1521
    %v1747 = vsub.f32 0.0, %v1523
    %v1748 = vsub.f32 0.0, %v1525
    %v1749 = vsub.f32 0.0, %v1527
    %v1750 = vsub.f32 0.0, %v1529
    %v1751 = vsub.f32 0.0, %v1531
    %v1752 = vsub.f32 0.0, %v1533
    %v1753 = vsub.f32 0.0, %v1535
    %v1754 = vsub.f32 0.0, %v1537
    %v1755 = vsub.f32 0.0, %v1539
    %v1756 = vsub.f32 0.0, %v1541
    %v1757 = vsub.f32 0.0, %v1543
    %v1758 = vsub.f32 0.0, %v1545
    %v1759 = vsub.f32 0.0, %v1547
    %v1760 = vsub.f32 0.0, %v1549
    %v1761 = vsub.f32 0.0, %v1551
    %v1762 = vsub.f32 0.0, %v1553
    %v1763 = vsub.f32 0.0, %v1555
    %v1764 = vsub.f32 0.0, %v1557
    %v1765 = vsub.f32 0.0, %v1559
    %v1766 = vsub.f32 0.0, %v1561
    %v1767 = vsub.f32 0.0, %v1563
    %v1768 = vsub.f32 0.0, %v1565
    %v1769 = vsub.f32 0.0, %v1567
    %v1770 = vsub.f32 0.0, %v1569
    %v1771 = vsub.f32 0.0, %v1571
    %v1772 = vsub.f32 0.0, %v1573
    %v1773 = vsub.f32 0.0, %v1575
    %v1774 = vsub.f32 0.0, %v1577
    %v1775 = vsub.f32 0.0, %v1579
    %v1776 = vsub.f32 0.0, %v1581
    %v1777 = vsub.f32 0.0, %v1583
    %v1778 = vsub.f32 0.0, %v1585
    %v1779 = vsub.f32 0.0, %v1587
    %v1780 = vsub.f32 0.0, %v1589
    %v1781 = vsub.f32 0.0, %v1591
    %v1782 = vsub.f32 0.0, %v1593
    %v1783 = vsub.f32 0.0, %v1595
    %v1784 = vsub.f32 0.0, %v1597
    %v1785 = vsub.f32 0.0, %v1599
    %v1786 = vsub.f32 0.0, %v1601
    %v1787 = vsub.f32 0.0, %v1603
    %v1788 = vsub.f32 0.0, %v1605
    %v1789 = vsub.f32 0.0, %v1607
    %v1790 = vsub.f32 0.0, %v1609
    %v1791 = vsub.f32 0.0, %v1611
    %v1792 = vsub.f32 0.0, %v1613
    %v1793 = vsub.f32 0.0, %v1615
    %v1794 = vsub.f32 0.0, %v1617
    %v1795 = vsub.f32 0.0, %v1619
    %v1796 = vsub.f32 0.0, %v1621
    %v1797 = vsub.f32 0.0, %v1623
    %v1798 = vsub.f32 0.0, %v1625
    %v1799 = vsub.f32 0.0, %v1627
    %v1800 = vsub.f32 0.0, %v1629
    %v1801 = vsub.f32 0.0, %v1631
    %v1802 = vsub.f32 0.0, %v1633
    %v1803 = vsub.f32 0.0, %v1635
    %v1804 = vsub.f32 0.0, %v1637
    %v1805 = vsub.f32 0.0, %v1639
    %v1806 = vsub.f32 0.0, %v1641
    %v1807 = vsub.f32 0.0, %v1643
    %v1808 = vsub.f32 0.0, %v1645
    %v1809 = vsub.f32 0.0, %v1647
    %v1810 = vsub.f32 0.0, %v1649
    %v1811 = vsub.f32 0.0, %v1651
    %v1812 = vsub.f32 0.0, %v1653
    %v1813 = vsub.f32 0.0, %v1655
    %v1814 = vsub.f32 0.0, %v1657
    %v1815 = vsub.f32 0.0, %v1659
    %v1816 = vsub.f32 0.0, %v1661
    %v1817 = vsub.f32 0.0, %v1663
    %v1818 = vsub.f32 0.0, %v1665
    %v1819 = vsub.f32 0.0, %v1667
    %v1820 = vsub.f32 0.0, %v1669
    %v1821 = vsub.f32 0.0, %v1671
    %v1822 = vsub.f32 0.0, %v1673
    %v1823 = vsub.f32 0.0, %v1675
    %v1824 = vsub.f32 0.0, %v1677
    %v1825 = vsub.f32 0.0, %v1679
    %v1826 = vsub.f32 0.0, %v1681
    %v1827 = vsub.f32 0.0, %v1683
    %v1828 = vsub.f32 0.0, %v1685
    %v1829 = vsub.f32 0.0, %v1687
    %v1830 = vsub.f32 0.0, %v1689
    %v1831 = vsub.f32 0.0, %v1691
    %v1832 = vsub.f32 0.0, %v1693
    %v1833 = vsub.f32 0.0, %v1695
    %v1834 = vsub.f32 0.0, %v1697
    %v1835 = vsub.f32 0.0, %v1699
    %v1836 = vsub.f32 0.0, %v1701
    %v1837 = vsub.f32 0.0, %v1703
    %v1838 = vsub.f32 0.0, %v1705
    %v1839 = vsub.f32 0.0, %v1707
    %v1840 = vsub.f32 0.0, %v1709
    %v1841 = vsub.f32 0.0, %v1711
    %v1842 = vsub.f32 0.0, %v1713
    %v1843 = vsub.f32 0.0, %v1715
    %v1972 = vlaneseq
    %v1973 = vand.u32 %v1972, 127
    %v1974 = vlaneseq
    %v1975 = vshrl.u32 %v1974, 7
    %v1976 = vsub.s32 %v1973, %v1975
    %v1977 = vrot.slane %v1716, %v1976
    %v1978 = vadd.s32 %v1973, 4294967288
    %v1979 = vlaneseq
    %v1980 = vshrl.u32 %v1979, 7
    %v1981 = vsub.s32 %v1978, %v1980
    %v1982 = vrot.slane %v1717, %v1981
    %vm1983 = vcmask 130112
    %v1984 = vsel %vm1983, %v1982, %v1977
    %v1985 = vadd.s32 %v1973, 4294967280
    %v1986 = vlaneseq
    %v1987 = vshrl.u32 %v1986, 7
    %v1988 = vsub.s32 %v1985, %v1987
    %v1989 = vrot.slane %v1718, %v1988
    %vm1990 = vcmask 195712
    %v1991 = vsel %vm1990, %v1989, %v1984
    %v1992 = vadd.s32 %v1973, 4294967272
    %v1993 = vlaneseq
    %v1994 = vshrl.u32 %v1993, 7
    %v1995 = vsub.s32 %v1992, %v1994
    %v1996 = vrot.slane %v1719, %v1995
    %vm1997 = vcmask 261312
    %v1998 = vsel %vm1997, %v1996, %v1991
    %v1999 = vadd.s32 %v1973, 4294967264
    %v2000 = vlaneseq
    %v2001 = vshrl.u32 %v2000, 7
    %v2002 = vsub.s32 %v1999, %v2001
    %v2003 = vrot.slane %v1720, %v2002
    %vm2004 = vcmask 326912
    %v2005 = vsel %vm2004, %v2003, %v1998
    %v2006 = vadd.s32 %v1973, 4294967256
    %v2007 = vlaneseq
    %v2008 = vshrl.u32 %v2007, 7
    %v2009 = vsub.s32 %v2006, %v2008
    %v2010 = vrot.slane %v1721, %v2009
    %vm2011 = vcmask 392512
    %v2012 = vsel %vm2011, %v2010, %v2005
    %v2013 = vadd.s32 %v1973, 4294967248
    %v2014 = vlaneseq
    %v2015 = vshrl.u32 %v2014, 7
    %v2016 = vsub.s32 %v2013, %v2015
    %v2017 = vrot.slane %v1722, %v2016
    %vm2018 = vcmask 458112
    %v2019 = vsel %vm2018, %v2017, %v2012
    %v2020 = vadd.s32 %v1973, 4294967240
    %v2021 = vlaneseq
    %v2022 = vshrl.u32 %v2021, 7
    %v2023 = vsub.s32 %v2020, %v2022
    %v2024 = vrot.slane %v1723, %v2023
    %vm2025 = vcmask 523712
    %v2026 = vsel %vm2025, %v2024, %v2019
    %v2027 = vadd.s32 %v1973, 4294967232
    %v2028 = vlaneseq
    %v2029 = vshrl.u32 %v2028, 7
    %v2030 = vsub.s32 %v2027, %v2029
    %v2031 = vrot.slane %v1724, %v2030
    %vm2032 = vcmask 589312
    %v2033 = vsel %vm2032, %v2031, %v2026
    %v2034 = vadd.s32 %v1973, 4294967224
    %v2035 = vlaneseq
    %v2036 = vshrl.u32 %v2035, 7
    %v2037 = vsub.s32 %v2034, %v2036
    %v2038 = vrot.slane %v1725, %v2037
    %vm2039 = vcmask 654912
    %v2040 = vsel %vm2039, %v2038, %v2033
    %v2041 = vadd.s32 %v1973, 4294967216
    %v2042 = vlaneseq
    %v2043 = vshrl.u32 %v2042, 7
    %v2044 = vsub.s32 %v2041, %v2043
    %v2045 = vrot.slane %v1726, %v2044
    %vm2046 = vcmask 720512
    %v2047 = vsel %vm2046, %v2045, %v2040
    %v2048 = vadd.s32 %v1973, 4294967208
    %v2049 = vlaneseq
    %v2050 = vshrl.u32 %v2049, 7
    %v2051 = vsub.s32 %v2048, %v2050
    %v2052 = vrot.slane %v1727, %v2051
    %vm2053 = vcmask 786112
    %v2054 = vsel %vm2053, %v2052, %v2047
    %v2055 = vadd.s32 %v1973, 4294967200
    %v2056 = vlaneseq
    %v2057 = vshrl.u32 %v2056, 7
    %v2058 = vsub.s32 %v2055, %v2057
    %v2059 = vrot.slane %v1728, %v2058
    %vm2060 = vcmask 851712
    %v2061 = vsel %vm2060, %v2059, %v2054
    %v2062 = vadd.s32 %v1973, 4294967192
    %v2063 = vlaneseq
    %v2064 = vshrl.u32 %v2063, 7
    %v2065 = vsub.s32 %v2062, %v2064
    %v2066 = vrot.slane %v1729, %v2065
    %vm2067 = vcmask 917312
    %v2068 = vsel %vm2067, %v2066, %v2061
    %v2069 = vadd.s32 %v1973, 4294967184
    %v2070 = vlaneseq
    %v2071 = vshrl.u32 %v2070, 7
    %v2072 = vsub.s32 %v2069, %v2071
    %v2073 = vrot.slane %v1730, %v2072
    %vm2074 = vcmask 982912
    %v2075 = vsel %vm2074, %v2073, %v2068
    %v2076 = vadd.s32 %v1973, 4294967176
    %v2077 = vlaneseq
    %v2078 = vshrl.u32 %v2077, 7
    %v2079 = vsub.s32 %v2076, %v2078
    %v2080 = vrot.slane %v1731, %v2079
    %vm2081 = vcmask 1048512
    %v2082 = vsel %vm2081, %v2080, %v2075
    %v2083 = vlaneseq
    %v2084 = vshrl.u32 %v2083, 7
    %v2085 = vsub.s32 %v1973, %v2084
    %v2086 = vrot.slane %v1732, %v2085
    %v2087 = vlaneseq
    %v2088 = vshrl.u32 %v2087, 7
    %v2089 = vsub.s32 %v1978, %v2088
    %v2090 = vrot.slane %v1733, %v2089
    %v2091 = vsel %vm1983, %v2090, %v2086
    %v2092 = vlaneseq
    %v2093 = vshrl.u32 %v2092, 7
    %v2094 = vsub.s32 %v1985, %v2093
    %v2095 = vrot.slane %v1734, %v2094
    %v2096 = vsel %vm1990, %v2095, %v2091
    %v2097 = vlaneseq
    %v2098 = vshrl.u32 %v2097, 7
    %v2099 = vsub.s32 %v1992, %v2098
    %v2100 = vrot.slane %v1735, %v2099
    %v2101 = vsel %vm1997, %v2100, %v2096
    %v2102 = vlaneseq
    %v2103 = vshrl.u32 %v2102, 7
    %v2104 = vsub.s32 %v1999, %v2103
    %v2105 = vrot.slane %v1736, %v2104
    %v2106 = vsel %vm2004, %v2105, %v2101
    %v2107 = vlaneseq
    %v2108 = vshrl.u32 %v2107, 7
    %v2109 = vsub.s32 %v2006, %v2108
    %v2110 = vrot.slane %v1737, %v2109
    %v2111 = vsel %vm2011, %v2110, %v2106
    %v2112 = vlaneseq
    %v2113 = vshrl.u32 %v2112, 7
    %v2114 = vsub.s32 %v2013, %v2113
    %v2115 = vrot.slane %v1738, %v2114
    %v2116 = vsel %vm2018, %v2115, %v2111
    %v2117 = vlaneseq
    %v2118 = vshrl.u32 %v2117, 7
    %v2119 = vsub.s32 %v2020, %v2118
    %v2120 = vrot.slane %v1739, %v2119
    %v2121 = vsel %vm2025, %v2120, %v2116
    %v2122 = vlaneseq
    %v2123 = vshrl.u32 %v2122, 7
    %v2124 = vsub.s32 %v2027, %v2123
    %v2125 = vrot.slane %v1740, %v2124
    %v2126 = vsel %vm2032, %v2125, %v2121
    %v2127 = vlaneseq
    %v2128 = vshrl.u32 %v2127, 7
    %v2129 = vsub.s32 %v2034, %v2128
    %v2130 = vrot.slane %v1741, %v2129
    %v2131 = vsel %vm2039, %v2130, %v2126
    %v2132 = vlaneseq
    %v2133 = vshrl.u32 %v2132, 7
    %v2134 = vsub.s32 %v2041, %v2133
    %v2135 = vrot.slane %v1742, %v2134
    %v2136 = vsel %vm2046, %v2135, %v2131
    %v2137 = vlaneseq
    %v2138 = vshrl.u32 %v2137, 7
    %v2139 = vsub.s32 %v2048, %v2138
    %v2140 = vrot.slane %v1743, %v2139
    %v2141 = vsel %vm2053, %v2140, %v2136
    %v2142 = vlaneseq
    %v2143 = vshrl.u32 %v2142, 7
    %v2144 = vsub.s32 %v2055, %v2143
    %v2145 = vrot.slane %v1744, %v2144
    %v2146 = vsel %vm2060, %v2145, %v2141
    %v2147 = vlaneseq
    %v2148 = vshrl.u32 %v2147, 7
    %v2149 = vsub.s32 %v2062, %v2148
    %v2150 = vrot.slane %v1745, %v2149
    %v2151 = vsel %vm2067, %v2150, %v2146
    %v2152 = vlaneseq
    %v2153 = vshrl.u32 %v2152, 7
    %v2154 = vsub.s32 %v2069, %v2153
    %v2155 = vrot.slane %v1746, %v2154
    %v2156 = vsel %vm2074, %v2155, %v2151
    %v2157 = vlaneseq
    %v2158 = vshrl.u32 %v2157, 7
    %v2159 = vsub.s32 %v2076, %v2158
    %v2160 = vrot.slane %v1747, %v2159
    %v2161 = vsel %vm2081, %v2160, %v2156
    %v2162 = vlaneseq
    %v2163 = vshrl.u32 %v2162, 7
    %v2164 = vsub.s32 %v1973, %v2163
    %v2165 = vrot.slane %v1748, %v2164
    %v2166 = vlaneseq
    %v2167 = vshrl.u32 %v2166, 7
    %v2168 = vsub.s32 %v1978, %v2167
    %v2169 = vrot.slane %v1749, %v2168
    %v2170 = vsel %vm1983, %v2169, %v2165
    %v2171 = vlaneseq
    %v2172 = vshrl.u32 %v2171, 7
    %v2173 = vsub.s32 %v1985, %v2172
    %v2174 = vrot.slane %v1750, %v2173
    %v2175 = vsel %vm1990, %v2174, %v2170
    %v2176 = vlaneseq
    %v2177 = vshrl.u32 %v2176, 7
    %v2178 = vsub.s32 %v1992, %v2177
    %v2179 = vrot.slane %v1751, %v2178
    %v2180 = vsel %vm1997, %v2179, %v2175
    %v2181 = vlaneseq
    %v2182 = vshrl.u32 %v2181, 7
    %v2183 = vsub.s32 %v1999, %v2182
    %v2184 = vrot.slane %v1752, %v2183
    %v2185 = vsel %vm2004, %v2184, %v2180
    %v2186 = vlaneseq
    %v2187 = vshrl.u32 %v2186, 7
    %v2188 = vsub.s32 %v2006, %v2187
    %v2189 = vrot.slane %v1753, %v2188
    %v2190 = vsel %vm2011, %v2189, %v2185
    %v2191 = vlaneseq
    %v2192 = vshrl.u32 %v2191, 7
    %v2193 = vsub.s32 %v2013, %v2192
    %v2194 = vrot.slane %v1754, %v2193
    %v2195 = vsel %vm2018, %v2194, %v2190
    %v2196 = vlaneseq
    %v2197 = vshrl.u32 %v2196, 7
    %v2198 = vsub.s32 %v2020, %v2197
    %v2199 = vrot.slane %v1755, %v2198
    %v2200 = vsel %vm2025, %v2199, %v2195
    %v2201 = vlaneseq
    %v2202 = vshrl.u32 %v2201, 7
    %v2203 = vsub.s32 %v2027, %v2202
    %v2204 = vrot.slane %v1756, %v2203
    %v2205 = vsel %vm2032, %v2204, %v2200
    %v2206 = vlaneseq
    %v2207 = vshrl.u32 %v2206, 7
    %v2208 = vsub.s32 %v2034, %v2207
    %v2209 = vrot.slane %v1757, %v2208
    %v2210 = vsel %vm2039, %v2209, %v2205
    %v2211 = vlaneseq
    %v2212 = vshrl.u32 %v2211, 7
    %v2213 = vsub.s32 %v2041, %v2212
    %v2214 = vrot.slane %v1758, %v2213
    %v2215 = vsel %vm2046, %v2214, %v2210
    %v2216 = vlaneseq
    %v2217 = vshrl.u32 %v2216, 7
    %v2218 = vsub.s32 %v2048, %v2217
    %v2219 = vrot.slane %v1759, %v2218
    %v2220 = vsel %vm2053, %v2219, %v2215
    %v2221 = vlaneseq
    %v2222 = vshrl.u32 %v2221, 7
    %v2223 = vsub.s32 %v2055, %v2222
    %v2224 = vrot.slane %v1760, %v2223
    %v2225 = vsel %vm2060, %v2224, %v2220
    %v2226 = vlaneseq
    %v2227 = vshrl.u32 %v2226, 7
    %v2228 = vsub.s32 %v2062, %v2227
    %v2229 = vrot.slane %v1761, %v2228
    %v2230 = vsel %vm2067, %v2229, %v2225
    %v2231 = vlaneseq
    %v2232 = vshrl.u32 %v2231, 7
    %v2233 = vsub.s32 %v2069, %v2232
    %v2234 = vrot.slane %v1762, %v2233
    %v2235 = vsel %vm2074, %v2234, %v2230
    %v2236 = vlaneseq
    %v2237 = vshrl.u32 %v2236, 7
    %v2238 = vsub.s32 %v2076, %v2237
    %v2239 = vrot.slane %v1763, %v2238
    %v2240 = vsel %vm2081, %v2239, %v2235
    %v2241 = vlaneseq
    %v2242 = vshrl.u32 %v2241, 7
    %v2243 = vsub.s32 %v1973, %v2242
    %v2244 = vrot.slane %v1764, %v2243
    %v2245 = vlaneseq
    %v2246 = vshrl.u32 %v2245, 7
    %v2247 = vsub.s32 %v1978, %v2246
    %v2248 = vrot.slane %v1765, %v2247
    %v2249 = vsel %vm1983, %v2248, %v2244
    %v2250 = vlaneseq
    %v2251 = vshrl.u32 %v2250, 7
    %v2252 = vsub.s32 %v1985, %v2251
    %v2253 = vrot.slane %v1766, %v2252
    %v2254 = vsel %vm1990, %v2253, %v2249
    %v2255 = vlaneseq
    %v2256 = vshrl.u32 %v2255, 7
    %v2257 = vsub.s32 %v1992, %v2256
    %v2258 = vrot.slane %v1767, %v2257
    %v2259 = vsel %vm1997, %v2258, %v2254
    %v2260 = vlaneseq
    %v2261 = vshrl.u32 %v2260, 7
    %v2262 = vsub.s32 %v1999, %v2261
    %v2263 = vrot.slane %v1768, %v2262
    %v2264 = vsel %vm2004, %v2263, %v2259
    %v2265 = vlaneseq
    %v2266 = vshrl.u32 %v2265, 7
    %v2267 = vsub.s32 %v2006, %v2266
    %v2268 = vrot.slane %v1769, %v2267
    %v2269 = vsel %vm2011, %v2268, %v2264
    %v2270 = vlaneseq
    %v2271 = vshrl.u32 %v2270, 7
    %v2272 = vsub.s32 %v2013, %v2271
    %v2273 = vrot.slane %v1770, %v2272
    %v2274 = vsel %vm2018, %v2273, %v2269
    %v2275 = vlaneseq
    %v2276 = vshrl.u32 %v2275, 7
    %v2277 = vsub.s32 %v2020, %v2276
    %v2278 = vrot.slane %v1771, %v2277
    %v2279 = vsel %vm2025, %v2278, %v2274
    %v2280 = vlaneseq
    %v2281 = vshrl.u32 %v2280, 7
    %v2282 = vsub.s32 %v2027, %v2281
    %v2283 = vrot.slane %v1772, %v2282
    %v2284 = vsel %vm2032, %v2283, %v2279
    %v2285 = vlaneseq
    %v2286 = vshrl.u32 %v2285, 7
    %v2287 = vsub.s32 %v2034, %v2286
    %v2288 = vrot.slane %v1773, %v2287
    %v2289 = vsel %vm2039, %v2288, %v2284
    %v2290 = vlaneseq
    %v2291 = vshrl.u32 %v2290, 7
    %v2292 = vsub.s32 %v2041, %v2291
    %v2293 = vrot.slane %v1774, %v2292
    %v2294 = vsel %vm2046, %v2293, %v2289
    %v2295 = vlaneseq
    %v2296 = vshrl.u32 %v2295, 7
    %v2297 = vsub.s32 %v2048, %v2296
    %v2298 = vrot.slane %v1775, %v2297
    %v2299 = vsel %vm2053, %v2298, %v2294
    %v2300 = vlaneseq
    %v2301 = vshrl.u32 %v2300, 7
    %v2302 = vsub.s32 %v2055, %v2301
    %v2303 = vrot.slane %v1776, %v2302
    %v2304 = vsel %vm2060, %v2303, %v2299
    %v2305 = vlaneseq
    %v2306 = vshrl.u32 %v2305, 7
    %v2307 = vsub.s32 %v2062, %v2306
    %v2308 = vrot.slane %v1777, %v2307
    %v2309 = vsel %vm2067, %v2308, %v2304
    %v2310 = vlaneseq
    %v2311 = vshrl.u32 %v2310, 7
    %v2312 = vsub.s32 %v2069, %v2311
    %v2313 = vrot.slane %v1778, %v2312
    %v2314 = vsel %vm2074, %v2313, %v2309
    %v2315 = vlaneseq
    %v2316 = vshrl.u32 %v2315, 7
    %v2317 = vsub.s32 %v2076, %v2316
    %v2318 = vrot.slane %v1779, %v2317
    %v2319 = vsel %vm2081, %v2318, %v2314
    %v2320 = vlaneseq
    %v2321 = vshrl.u32 %v2320, 7
    %v2322 = vsub.s32 %v1973, %v2321
    %v2323 = vrot.slane %v1780, %v2322
    %v2324 = vlaneseq
    %v2325 = vshrl.u32 %v2324, 7
    %v2326 = vsub.s32 %v1978, %v2325
    %v2327 = vrot.slane %v1781, %v2326
    %v2328 = vsel %vm1983, %v2327, %v2323
    %v2329 = vlaneseq
    %v2330 = vshrl.u32 %v2329, 7
    %v2331 = vsub.s32 %v1985, %v2330
    %v2332 = vrot.slane %v1782, %v2331
    %v2333 = vsel %vm1990, %v2332, %v2328
    %v2334 = vlaneseq
    %v2335 = vshrl.u32 %v2334, 7
    %v2336 = vsub.s32 %v1992, %v2335
    %v2337 = vrot.slane %v1783, %v2336
    %v2338 = vsel %vm1997, %v2337, %v2333
    %v2339 = vlaneseq
    %v2340 = vshrl.u32 %v2339, 7
    %v2341 = vsub.s32 %v1999, %v2340
    %v2342 = vrot.slane %v1784, %v2341
    %v2343 = vsel %vm2004, %v2342, %v2338
    %v2344 = vlaneseq
    %v2345 = vshrl.u32 %v2344, 7
    %v2346 = vsub.s32 %v2006, %v2345
    %v2347 = vrot.slane %v1785, %v2346
    %v2348 = vsel %vm2011, %v2347, %v2343
    %v2349 = vlaneseq
    %v2350 = vshrl.u32 %v2349, 7
    %v2351 = vsub.s32 %v2013, %v2350
    %v2352 = vrot.slane %v1786, %v2351
    %v2353 = vsel %vm2018, %v2352, %v2348
    %v2354 = vlaneseq
    %v2355 = vshrl.u32 %v2354, 7
    %v2356 = vsub.s32 %v2020, %v2355
    %v2357 = vrot.slane %v1787, %v2356
    %v2358 = vsel %vm2025, %v2357, %v2353
    %v2359 = vlaneseq
    %v2360 = vshrl.u32 %v2359, 7
    %v2361 = vsub.s32 %v2027, %v2360
    %v2362 = vrot.slane %v1788, %v2361
    %v2363 = vsel %vm2032, %v2362, %v2358
    %v2364 = vlaneseq
    %v2365 = vshrl.u32 %v2364, 7
    %v2366 = vsub.s32 %v2034, %v2365
    %v2367 = vrot.slane %v1789, %v2366
    %v2368 = vsel %vm2039, %v2367, %v2363
    %v2369 = vlaneseq
    %v2370 = vshrl.u32 %v2369, 7
    %v2371 = vsub.s32 %v2041, %v2370
    %v2372 = vrot.slane %v1790, %v2371
    %v2373 = vsel %vm2046, %v2372, %v2368
    %v2374 = vlaneseq
    %v2375 = vshrl.u32 %v2374, 7
    %v2376 = vsub.s32 %v2048, %v2375
    %v2377 = vrot.slane %v1791, %v2376
    %v2378 = vsel %vm2053, %v2377, %v2373
    %v2379 = vlaneseq
    %v2380 = vshrl.u32 %v2379, 7
    %v2381 = vsub.s32 %v2055, %v2380
    %v2382 = vrot.slane %v1792, %v2381
    %v2383 = vsel %vm2060, %v2382, %v2378
    %v2384 = vlaneseq
    %v2385 = vshrl.u32 %v2384, 7
    %v2386 = vsub.s32 %v2062, %v2385
    %v2387 = vrot.slane %v1793, %v2386
    %v2388 = vsel %vm2067, %v2387, %v2383
    %v2389 = vlaneseq
    %v2390 = vshrl.u32 %v2389, 7
    %v2391 = vsub.s32 %v2069, %v2390
    %v2392 = vrot.slane %v1794, %v2391
    %v2393 = vsel %vm2074, %v2392, %v2388
    %v2394 = vlaneseq
    %v2395 = vshrl.u32 %v2394, 7
    %v2396 = vsub.s32 %v2076, %v2395
    %v2397 = vrot.slane %v1795, %v2396
    %v2398 = vsel %vm2081, %v2397, %v2393
    %v2399 = vlaneseq
    %v2400 = vshrl.u32 %v2399, 7
    %v2401 = vsub.s32 %v1973, %v2400
    %v2402 = vrot.slane %v1796, %v2401
    %v2403 = vlaneseq
    %v2404 = vshrl.u32 %v2403, 7
    %v2405 = vsub.s32 %v1978, %v2404
    %v2406 = vrot.slane %v1797, %v2405
    %v2407 = vsel %vm1983, %v2406, %v2402
    %v2408 = vlaneseq
    %v2409 = vshrl.u32 %v2408, 7
    %v2410 = vsub.s32 %v1985, %v2409
    %v2411 = vrot.slane %v1798, %v2410
    %v2412 = vsel %vm1990, %v2411, %v2407
    %v2413 = vlaneseq
    %v2414 = vshrl.u32 %v2413, 7
    %v2415 = vsub.s32 %v1992, %v2414
    %v2416 = vrot.slane %v1799, %v2415
    %v2417 = vsel %vm1997, %v2416, %v2412
    %v2418 = vlaneseq
    %v2419 = vshrl.u32 %v2418, 7
    %v2420 = vsub.s32 %v1999, %v2419
    %v2421 = vrot.slane %v1800, %v2420
    %v2422 = vsel %vm2004, %v2421, %v2417
    %v2423 = vlaneseq
    %v2424 = vshrl.u32 %v2423, 7
    %v2425 = vsub.s32 %v2006, %v2424
    %v2426 = vrot.slane %v1801, %v2425
    %v2427 = vsel %vm2011, %v2426, %v2422
    %v2428 = vlaneseq
    %v2429 = vshrl.u32 %v2428, 7
    %v2430 = vsub.s32 %v2013, %v2429
    %v2431 = vrot.slane %v1802, %v2430
    %v2432 = vsel %vm2018, %v2431, %v2427
    %v2433 = vlaneseq
    %v2434 = vshrl.u32 %v2433, 7
    %v2435 = vsub.s32 %v2020, %v2434
    %v2436 = vrot.slane %v1803, %v2435
    %v2437 = vsel %vm2025, %v2436, %v2432
    %v2438 = vlaneseq
    %v2439 = vshrl.u32 %v2438, 7
    %v2440 = vsub.s32 %v2027, %v2439
    %v2441 = vrot.slane %v1804, %v2440
    %v2442 = vsel %vm2032, %v2441, %v2437
    %v2443 = vlaneseq
    %v2444 = vshrl.u32 %v2443, 7
    %v2445 = vsub.s32 %v2034, %v2444
    %v2446 = vrot.slane %v1805, %v2445
    %v2447 = vsel %vm2039, %v2446, %v2442
    %v2448 = vlaneseq
    %v2449 = vshrl.u32 %v2448, 7
    %v2450 = vsub.s32 %v2041, %v2449
    %v2451 = vrot.slane %v1806, %v2450
    %v2452 = vsel %vm2046, %v2451, %v2447
    %v2453 = vlaneseq
    %v2454 = vshrl.u32 %v2453, 7
    %v2455 = vsub.s32 %v2048, %v2454
    %v2456 = vrot.slane %v1807, %v2455
    %v2457 = vsel %vm2053, %v2456, %v2452
    %v2458 = vlaneseq
    %v2459 = vshrl.u32 %v2458, 7
    %v2460 = vsub.s32 %v2055, %v2459
    %v2461 = vrot.slane %v1808, %v2460
    %v2462 = vsel %vm2060, %v2461, %v2457
    %v2463 = vlaneseq
    %v2464 = vshrl.u32 %v2463, 7
    %v2465 = vsub.s32 %v2062, %v2464
    %v2466 = vrot.slane %v1809, %v2465
    %v2467 = vsel %vm2067, %v2466, %v2462
    %v2468 = vlaneseq
    %v2469 = vshrl.u32 %v2468, 7
    %v2470 = vsub.s32 %v2069, %v2469
    %v2471 = vrot.slane %v1810, %v2470
    %v2472 = vsel %vm2074, %v2471, %v2467
    %v2473 = vlaneseq
    %v2474 = vshrl.u32 %v2473, 7
    %v2475 = vsub.s32 %v2076, %v2474
    %v2476 = vrot.slane %v1811, %v2475
    %v2477 = vsel %vm2081, %v2476, %v2472
    %v2478 = vlaneseq
    %v2479 = vshrl.u32 %v2478, 7
    %v2480 = vsub.s32 %v1973, %v2479
    %v2481 = vrot.slane %v1812, %v2480
    %v2482 = vlaneseq
    %v2483 = vshrl.u32 %v2482, 7
    %v2484 = vsub.s32 %v1978, %v2483
    %v2485 = vrot.slane %v1813, %v2484
    %v2486 = vsel %vm1983, %v2485, %v2481
    %v2487 = vlaneseq
    %v2488 = vshrl.u32 %v2487, 7
    %v2489 = vsub.s32 %v1985, %v2488
    %v2490 = vrot.slane %v1814, %v2489
    %v2491 = vsel %vm1990, %v2490, %v2486
    %v2492 = vlaneseq
    %v2493 = vshrl.u32 %v2492, 7
    %v2494 = vsub.s32 %v1992, %v2493
    %v2495 = vrot.slane %v1815, %v2494
    %v2496 = vsel %vm1997, %v2495, %v2491
    %v2497 = vlaneseq
    %v2498 = vshrl.u32 %v2497, 7
    %v2499 = vsub.s32 %v1999, %v2498
    %v2500 = vrot.slane %v1816, %v2499
    %v2501 = vsel %vm2004, %v2500, %v2496
    %v2502 = vlaneseq
    %v2503 = vshrl.u32 %v2502, 7
    %v2504 = vsub.s32 %v2006, %v2503
    %v2505 = vrot.slane %v1817, %v2504
    %v2506 = vsel %vm2011, %v2505, %v2501
    %v2507 = vlaneseq
    %v2508 = vshrl.u32 %v2507, 7
    %v2509 = vsub.s32 %v2013, %v2508
    %v2510 = vrot.slane %v1818, %v2509
    %v2511 = vsel %vm2018, %v2510, %v2506
    %v2512 = vlaneseq
    %v2513 = vshrl.u32 %v2512, 7
    %v2514 = vsub.s32 %v2020, %v2513
    %v2515 = vrot.slane %v1819, %v2514
    %v2516 = vsel %vm2025, %v2515, %v2511
    %v2517 = vlaneseq
    %v2518 = vshrl.u32 %v2517, 7
    %v2519 = vsub.s32 %v2027, %v2518
    %v2520 = vrot.slane %v1820, %v2519
    %v2521 = vsel %vm2032, %v2520, %v2516
    %v2522 = vlaneseq
    %v2523 = vshrl.u32 %v2522, 7
    %v2524 = vsub.s32 %v2034, %v2523
    %v2525 = vrot.slane %v1821, %v2524
    %v2526 = vsel %vm2039, %v2525, %v2521
    %v2527 = vlaneseq
    %v2528 = vshrl.u32 %v2527, 7
    %v2529 = vsub.s32 %v2041, %v2528
    %v2530 = vrot.slane %v1822, %v2529
    %v2531 = vsel %vm2046, %v2530, %v2526
    %v2532 = vlaneseq
    %v2533 = vshrl.u32 %v2532, 7
    %v2534 = vsub.s32 %v2048, %v2533
    %v2535 = vrot.slane %v1823, %v2534
    %v2536 = vsel %vm2053, %v2535, %v2531
    %v2537 = vlaneseq
    %v2538 = vshrl.u32 %v2537, 7
    %v2539 = vsub.s32 %v2055, %v2538
    %v2540 = vrot.slane %v1824, %v2539
    %v2541 = vsel %vm2060, %v2540, %v2536
    %v2542 = vlaneseq
    %v2543 = vshrl.u32 %v2542, 7
    %v2544 = vsub.s32 %v2062, %v2543
    %v2545 = vrot.slane %v1825, %v2544
    %v2546 = vsel %vm2067, %v2545, %v2541
    %v2547 = vlaneseq
    %v2548 = vshrl.u32 %v2547, 7
    %v2549 = vsub.s32 %v2069, %v2548
    %v2550 = vrot.slane %v1826, %v2549
    %v2551 = vsel %vm2074, %v2550, %v2546
    %v2552 = vlaneseq
    %v2553 = vshrl.u32 %v2552, 7
    %v2554 = vsub.s32 %v2076, %v2553
    %v2555 = vrot.slane %v1827, %v2554
    %v2556 = vsel %vm2081, %v2555, %v2551
    %v2557 = vlaneseq
    %v2558 = vshrl.u32 %v2557, 7
    %v2559 = vsub.s32 %v1973, %v2558
    %v2560 = vrot.slane %v1828, %v2559
    %v2561 = vlaneseq
    %v2562 = vshrl.u32 %v2561, 7
    %v2563 = vsub.s32 %v1978, %v2562
    %v2564 = vrot.slane %v1829, %v2563
    %v2565 = vsel %vm1983, %v2564, %v2560
    %v2566 = vlaneseq
    %v2567 = vshrl.u32 %v2566, 7
    %v2568 = vsub.s32 %v1985, %v2567
    %v2569 = vrot.slane %v1830, %v2568
    %v2570 = vsel %vm1990, %v2569, %v2565
    %v2571 = vlaneseq
    %v2572 = vshrl.u32 %v2571, 7
    %v2573 = vsub.s32 %v1992, %v2572
    %v2574 = vrot.slane %v1831, %v2573
    %v2575 = vsel %vm1997, %v2574, %v2570
    %v2576 = vlaneseq
    %v2577 = vshrl.u32 %v2576, 7
    %v2578 = vsub.s32 %v1999, %v2577
    %v2579 = vrot.slane %v1832, %v2578
    %v2580 = vsel %vm2004, %v2579, %v2575
    %v2581 = vlaneseq
    %v2582 = vshrl.u32 %v2581, 7
    %v2583 = vsub.s32 %v2006, %v2582
    %v2584 = vrot.slane %v1833, %v2583
    %v2585 = vsel %vm2011, %v2584, %v2580
    %v2586 = vlaneseq
    %v2587 = vshrl.u32 %v2586, 7
    %v2588 = vsub.s32 %v2013, %v2587
    %v2589 = vrot.slane %v1834, %v2588
    %v2590 = vsel %vm2018, %v2589, %v2585
    %v2591 = vlaneseq
    %v2592 = vshrl.u32 %v2591, 7
    %v2593 = vsub.s32 %v2020, %v2592
    %v2594 = vrot.slane %v1835, %v2593
    %v2595 = vsel %vm2025, %v2594, %v2590
    %v2596 = vlaneseq
    %v2597 = vshrl.u32 %v2596, 7
    %v2598 = vsub.s32 %v2027, %v2597
    %v2599 = vrot.slane %v1836, %v2598
    %v2600 = vsel %vm2032, %v2599, %v2595
    %v2601 = vlaneseq
    %v2602 = vshrl.u32 %v2601, 7
    %v2603 = vsub.s32 %v2034, %v2602
    %v2604 = vrot.slane %v1837, %v2603
    %v2605 = vsel %vm2039, %v2604, %v2600
    %v2606 = vlaneseq
    %v2607 = vshrl.u32 %v2606, 7
    %v2608 = vsub.s32 %v2041, %v2607
    %v2609 = vrot.slane %v1838, %v2608
    %v2610 = vsel %vm2046, %v2609, %v2605
    %v2611 = vlaneseq
    %v2612 = vshrl.u32 %v2611, 7
    %v2613 = vsub.s32 %v2048, %v2612
    %v2614 = vrot.slane %v1839, %v2613
    %v2615 = vsel %vm2053, %v2614, %v2610
    %v2616 = vlaneseq
    %v2617 = vshrl.u32 %v2616, 7
    %v2618 = vsub.s32 %v2055, %v2617
    %v2619 = vrot.slane %v1840, %v2618
    %v2620 = vsel %vm2060, %v2619, %v2615
    %v2621 = vlaneseq
    %v2622 = vshrl.u32 %v2621, 7
    %v2623 = vsub.s32 %v2062, %v2622
    %v2624 = vrot.slane %v1841, %v2623
    %v2625 = vsel %vm2067, %v2624, %v2620
    %v2626 = vlaneseq
    %v2627 = vshrl.u32 %v2626, 7
    %v2628 = vsub.s32 %v2069, %v2627
    %v2629 = vrot.slane %v1842, %v2628
    %v2630 = vsel %vm2074, %v2629, %v2625
    %v2631 = vlaneseq
    %v2632 = vshrl.u32 %v2631, 7
    %v2633 = vsub.s32 %v2076, %v2632
    %v2634 = vrot.slane %v1843, %v2633
    %v2635 = vsel %vm2081, %v2634, %v2630
    %vm2636 = vcmask 1041409
    %v2637 = vsel %vm2636, %v2161, %v2082
    %vm2638 = vcmask 1042434
    %v2639 = vsel %vm2638, %v2240, %v2637
    %vm2640 = vcmask 1043459
    %v2641 = vsel %vm2640, %v2319, %v2639
    %vm2642 = vcmask 1044484
    %v2643 = vsel %vm2642, %v2398, %v2641
    %vm2644 = vcmask 1045509
    %v2645 = vsel %vm2644, %v2477, %v2643
    %vm2646 = vcmask 1046534
    %v2647 = vsel %vm2646, %v2556, %v2645
    %vm2648 = vcmask 1047559
    %v2649 = vsel %vm2648, %v2635, %v2647
    %2651 = vst [vmem:[%s14] sm:$0xff] %v2649
    // Predicated region
    $region82: #{predicate_visual_forward.1} parent=1 // pred_check
      _
    $region83: #{predicate_visual_forward.1} parent=1 // pred_check_branch
      %2653 = sbr.rel (0) target = $region85
    $region84: #{predicate_visual_forward.1} parent=1 // pred_region
      _
    $region85: #{predicate_visual_forward.1} parent=1 // pred_fallthru
      _
    // Predicated region
    $region86: #{predicate_visual_forward.1} parent=1 // pred_check
      _
    $region87: #{predicate_visual_forward.1} parent=1 // pred_check_branch
      %2655 = sbr.rel (0) target = $region89
    $region88: #{predicate_visual_forward.1} parent=1 // pred_region
      _
    $region89: #{predicate_visual_forward.1} parent=1 // pred_fallthru
      _
    // Predicated region
    $region90: #{predicate_visual_forward.1} parent=1 // pred_check
      _
    $region91: #{predicate_visual_forward.1} parent=1 // pred_check_branch
      %2657 = sbr.rel (0) target = $region93
    $region92: #{predicate_visual_forward.1} parent=1 // pred_region
      _
    $region93: #{predicate_visual_forward.1} parent=1 // pred_fallthru
      _
    // Predicated region
    $region94: #{predicate_visual_forward.1} parent=1 // pred_check
      _
    $region95: #{predicate_visual_forward.1} parent=1 // pred_check_branch
      %2659 = sbr.rel (0) target = $region97
    $region96: #{predicate_visual_forward.1} parent=1 // pred_region
      _
    $region97: #{predicate_visual_forward.1} parent=1 // pred_fallthru
      _
    %2660 = vsyncpa [#allocation4], 1
    %2661 = vsyncpa [#allocation6], 1
    %2662 = vsyncpa [#allocation9], 1

</llo_original>
